<compile_context>
chip_gen: v7x
topology: tpu7x:2x2x1
jax: 0.10.0
libtpu: 0.0.40
codegen_flags: <defaults>
</compile_context>

<pallas_src>
import functools
import math

import jax
import jax.numpy as jnp
from jax import lax
from jax.experimental import pallas as pl
from jax.experimental.pallas import tpu as pltpu


# ----------------------------------------------------------------------------
# Fused kernel: all decoder layers + trend accumulation + LayerNorm + projection
# One grid step == one block of TB batch elements.
# ----------------------------------------------------------------------------
def _decoder_fused_kernel(x_ref, cross_ref, trend_ref,
                          wq_ref, wkv_ref, wo_ref, wt_ref,
                          ln_ref, wp_ref, bp_ref,
                          x_out_ref, trend_out_ref, *, mm_dtype):
    TB, L, D = x_ref.shape
    S = cross_ref.shape[1]
    Cp = trend_ref.shape[2]
    NL = wq_ref.shape[0]   # static

    def mm(a, b):
        # MXU matmul; operands optionally cast (bf16 on v6e/v7x), f32 accumulate.
        return jnp.dot(a.astype(mm_dtype), b.astype(mm_dtype),
                       preferred_element_type=jnp.float32)

    # Flatten the batch tile into the matmul M dimension (weights are shared
    # across batch, so Q / attn-out / trend / projection see TB*L rows).
    x2 = x_ref[...].reshape(TB * L, D)            # (TB*L, D)  f32
    c2 = cross_ref[...].reshape(TB * S, D)        # (TB*S, D)  f32
    trend2 = trend_ref[...].reshape(TB * L, Cp)   # (TB*L, Cp) f32 accumulator

    scale = jnp.float32(1.0 / math.sqrt(D))

    # Hoisted, layer-invariant K/V: ONE lane-dense matmul for every layer's
    # K and V projection (output width 2*NL*D).
    kv = mm(c2, wkv_ref[...]).reshape(TB, S, 2 * NL * D)

    # Short static layer loop, fully unrolled (NL small); weights resident in
    # VMEM.  For larger NL use lax.fori_loop(..., unroll=True) instead.
    for l in range(NL):
        q = (mm(x2, wq_ref[l]) * scale).reshape(TB, L, D)
        k = kv[:, :, l * D:(l + 1) * D]                   # (TB, S, D)
        v = kv[:, :, (NL + l) * D:(NL + l + 1) * D]       # (TB, S, D)

        # scores: batched contraction over the feature dim (no materialized k.T)
        s = jnp.einsum('bld,bsd->bls', q.astype(mm_dtype), k.astype(mm_dtype),
                       preferred_element_type=jnp.float32)      # (TB, L, S)
        s = s - jnp.max(s, axis=-1, keepdims=True)
        p = jnp.exp(s)
        p = p / jnp.sum(p, axis=-1, keepdims=True)   # exact softmax (f32)

        ctx = jnp.einsum('bls,bsd->bld', p.astype(mm_dtype), v.astype(mm_dtype),
                         preferred_element_type=jnp.float32)    # (TB, L, D)

        x2 = x2 + mm(ctx.reshape(TB * L, D), wo_ref[l])
        # residual trend (d_model -> c_out, lane-padded), accumulated in-register
        trend2 = trend2 + mm(x2, wt_ref[l])

    # Fused LayerNorm(d_model) + projection(d_model -> c_out, lane-padded).
    # Elementwise math stays f32 (v5e has no bf16 VPU/EUP).
    gamma = ln_ref[0:1, :]                               # (1, D)
    beta = ln_ref[1:2, :]                                # (1, D)
    mu = jnp.mean(x2, axis=-1, keepdims=True)
    var = jnp.mean((x2 - mu) ** 2, axis=-1, keepdims=True)  # biased, like nn.LayerNorm
    xn = (x2 - mu) * lax.rsqrt(var + 1e-5)
    xn = xn * gamma + beta

    out = mm(xn, wp_ref[...]) + bp_ref[...]

    # Single lane-dense (128-wide) store per output per grid step.
    x_out_ref[...] = out.reshape(TB, L, Cp)
    trend_out_ref[...] = trend2.reshape(TB, L, Cp)


def _pick_batch_tile(B, L, S, max_rows=512):
    """Largest divisor of B keeping per-step activation rows modest."""
    cap = max(1, max_rows // max(L, S, 1))
    for cand in range(min(B, cap), 0, -1):
        if B % cand == 0:
            return cand
    return 1


# ----------------------------------------------------------------------------
# Decoder forward (mirrors the PyTorch Decoder.forward)
# ----------------------------------------------------------------------------
def decoder_forward(x, cross, trend, layer_params, norm_params, proj_params,
                    *, matmul_dtype=jnp.float32):
    attns = []   # PyTorch code never appends -> always returned empty

    B, L, D = x.shape
    S = cross.shape[1]
    C = trend.shape[2]
    NL = len(layer_params)

    # Lane-dense padding of the c_out dimension (C=4 -> 128) so trend / output
    # stores are full-width; sliced back after the kernel.
    Cp = ((C + 127) // 128) * 128
    pad_c = Cp - C

    # Stack / concatenate per-layer weights once -> VMEM-resident blocks.
    wq = jnp.stack([p[0] for p in layer_params])                        # (NL, D, D)
    wo = jnp.stack([p[3] for p in layer_params])                        # (NL, D, D)
    wt = jnp.pad(jnp.stack([p[4] for p in layer_params]),
                 ((0, 0), (0, 0), (0, pad_c)))                          # (NL, D, Cp)
    # Hoisted layer-invariant K/V projections: all Wk then all Wv -> (D, 2*NL*D)
    wkv = jnp.concatenate([p[1] for p in layer_params]
                          + [p[2] for p in layer_params], axis=1)

    trend_p = jnp.pad(trend, ((0, 0), (0, 0), (0, pad_c)))              # (B, L, Cp)

    gamma, beta = norm_params                                           # (1, D) each
    ln = jnp.concatenate([gamma, beta], axis=0)                         # (2, D)
    wp, bp = proj_params                                                # (D, C), (1, C)
    wp_p = jnp.pad(wp, ((0, 0), (0, pad_c)))                            # (D, Cp)
    bp_p = jnp.pad(bp, ((0, 0), (0, pad_c)))                            # (1, Cp)

    TB = _pick_batch_tile(B, L, S)    # TB == B at toy sizes -> grid of 1
    nb = B // TB

    kernel = functools.partial(_decoder_fused_kernel, mm_dtype=matmul_dtype)

    x_out_p, trend_out_p = pl.pallas_call(
        kernel,
        out_shape=(jax.ShapeDtypeStruct((B, L, Cp), jnp.float32),
                   jax.ShapeDtypeStruct((B, L, Cp), jnp.float32)),
        grid_spec=pltpu.PrefetchScalarGridSpec(
            num_scalar_prefetch=0,
            grid=(nb,),
            in_specs=[
                pl.BlockSpec((TB, L, D), lambda i: (i, 0, 0)),       # x
                pl.BlockSpec((TB, S, D), lambda i: (i, 0, 0)),       # cross
                pl.BlockSpec((TB, L, Cp), lambda i: (i, 0, 0)),      # trend (padded)
                pl.BlockSpec((NL, D, D), lambda i: (0, 0, 0)),       # Wq (all layers)
                pl.BlockSpec((D, 2 * NL * D), lambda i: (0, 0)),     # Wk|Wv concat
                pl.BlockSpec((NL, D, D), lambda i: (0, 0, 0)),       # Wo
                pl.BlockSpec((NL, D, Cp), lambda i: (0, 0, 0)),      # Wt (padded)
                pl.BlockSpec((2, D), lambda i: (0, 0)),              # gamma|beta
                pl.BlockSpec((D, Cp), lambda i: (0, 0)),             # Wp (padded)
                pl.BlockSpec((1, Cp), lambda i: (0, 0)),             # bp (padded)
            ],
            out_specs=[
                pl.BlockSpec((TB, L, Cp), lambda i: (i, 0, 0)),      # x out (padded)
                pl.BlockSpec((TB, L, Cp), lambda i: (i, 0, 0)),      # trend out (padded)
            ],
        ),
        # trend is a pure read-modify-write: alias padded trend input
        # (operand 2) onto the trend output (output 1).
        input_output_aliases={2: 1},
        compiler_params=pltpu.CompilerParams(
            dimension_semantics=("parallel",)),
    )(x, cross, trend_p, wq, wkv, wo, wt, ln, wp_p, bp_p)

    return x_out_p[..., :C], trend_out_p[..., :C], attns


# Pure-JAX reference for correctness checking.
def decoder_reference(x, cross, trend, layer_params, norm_params, proj_params):
    for (wq, wk, wv, wo, wt) in layer_params:
        q = x @ wq
        k = cross @ wk
        v = cross @ wv
        s = jnp.einsum("bld,bsd->bls", q, k) / math.sqrt(x.shape[-1])
        p = jax.nn.softmax(s, axis=-1)
        x = x + jnp.einsum("bls,bsd->bld", p, v) @ wo
        trend = trend + x @ wt
    gamma, beta = norm_params
    wp, bp = proj_params
    mu = jnp.mean(x, axis=-1, keepdims=True)
    var = jnp.mean((x - mu) ** 2, axis=-1, keepdims=True)
    xn = (x - mu) / jnp.sqrt(var + 1e-5) * gamma + beta
    return xn @ wp + bp, trend


if __name__ == "__main__":
    B, L, S, D, C = 2, 8, 16, 32, 4
    NUM_LAYERS = 2

    key = jax.random.PRNGKey(0)
    keys = jax.random.split(key, 4 + NUM_LAYERS * 5)

    x = jax.random.normal(keys[0], (B, L, D), dtype=jnp.float32)
    cross = jax.random.normal(keys[1], (B, S, D), dtype=jnp.float32)
    trend = jax.random.normal(keys[2], (B, L, C), dtype=jnp.float32)

    scale = 1.0 / math.sqrt(D)
    layer_params = []
    for i in range(NUM_LAYERS):
        kk = keys[3 + i * 5: 3 + (i + 1) * 5]
        wq = jax.random.normal(kk[0], (D, D), dtype=jnp.float32) * scale
        wk = jax.random.normal(kk[1], (D, D), dtype=jnp.float32) * scale
        wv = jax.random.normal(kk[2], (D, D), dtype=jnp.float32) * scale
        wo = jax.random.normal(kk[3], (D, D), dtype=jnp.float32) * scale
        wt = jax.random.normal(kk[4], (D, C), dtype=jnp.float32) * scale
        layer_params.append((wq, wk, wv, wo, wt))

    gamma = jnp.ones((1, D), dtype=jnp.float32)
    beta = jnp.zeros((1, D), dtype=jnp.float32)
    wp = jax.random.normal(keys[-1], (D, C), dtype=jnp.float32) * scale
    bp = jnp.zeros((1, C), dtype=jnp.float32)

    x_out, trend_out, attns = decoder_forward(
        x, cross, trend, layer_params, (gamma, beta), (wp, bp))
    jax.block_until_ready((x_out, trend_out))

    x_ref, trend_ref = decoder_reference(
        x, cross, trend, layer_params, (gamma, beta), (wp, bp))

    assert x_out.shape == (B, L, C) and trend_out.shape == (B, L, C)
    assert attns == []
    # Softmax normalization is exact (no approx reciprocal), all matmuls f32,
    # so the kernel tracks the pure-JAX reference tightly.
    assert jnp.allclose(x_out, x_ref, rtol=1e-4, atol=1e-4)
    assert jnp.allclose(trend_out, trend_ref, rtol=1e-4, atol=1e-4)

    print("KERNEL_OK")
</pallas_src>

<mosaic_0001>
module attributes {stable_mosaic.version = 11 : i64} {
  func.func @_decoder_fused_kernel(%arg0: i32, %arg1: memref<2x8x32xf32, #tpu.memory_space<vmem>>, %arg2: memref<2x16x32xf32, #tpu.memory_space<vmem>>, %arg3: memref<2x8x128xf32, #tpu.memory_space<vmem>>, %arg4: memref<2x32x32xf32, #tpu.memory_space<vmem>>, %arg5: memref<32x128xf32, #tpu.memory_space<vmem>>, %arg6: memref<2x32x32xf32, #tpu.memory_space<vmem>>, %arg7: memref<2x32x128xf32, #tpu.memory_space<vmem>>, %arg8: memref<2x32xf32, #tpu.memory_space<vmem>>, %arg9: memref<32x128xf32, #tpu.memory_space<vmem>>, %arg10: memref<1x128xf32, #tpu.memory_space<vmem>>, %arg11: memref<2x8x128xf32, #tpu.memory_space<vmem>>, %arg12: memref<2x8x128xf32, #tpu.memory_space<vmem>>) attributes {dimension_semantics = [#tpu.dimension_semantics<parallel>], iteration_bounds = array<i64: 1>, scalar_prefetch = 0 : i64, scratch_operands = 0 : i64, tpu.core_type = #tpu.core_type<tc>, window_params = [{transform_indices = @transform_0, window_bounds = array<i64: 2, 8, 32>}, {transform_indices = @transform_1, window_bounds = array<i64: 2, 16, 32>}, {transform_indices = @transform_2, window_bounds = array<i64: 2, 8, 128>}, {pipeline_mode = #tpu.pipeline_mode<synchronous>, transform_indices = @transform_3, window_bounds = array<i64: 2, 32, 32>}, {pipeline_mode = #tpu.pipeline_mode<synchronous>, transform_indices = @transform_4, window_bounds = array<i64: 32, 128>}, {pipeline_mode = #tpu.pipeline_mode<synchronous>, transform_indices = @transform_5, window_bounds = array<i64: 2, 32, 32>}, {pipeline_mode = #tpu.pipeline_mode<synchronous>, transform_indices = @transform_6, window_bounds = array<i64: 2, 32, 128>}, {pipeline_mode = #tpu.pipeline_mode<synchronous>, transform_indices = @transform_7, window_bounds = array<i64: 2, 32>}, {pipeline_mode = #tpu.pipeline_mode<synchronous>, transform_indices = @transform_8, window_bounds = array<i64: 32, 128>}, {pipeline_mode = #tpu.pipeline_mode<synchronous>, transform_indices = @transform_9, window_bounds = array<i64: 1, 128>}, {transform_indices = @transform_10, window_bounds = array<i64: 2, 8, 128>}, {transform_indices = @transform_11, window_bounds = array<i64: 2, 8, 128>}]} {
    %c0 = arith.constant 0 : index
    %c0_0 = arith.constant 0 : index
    %c0_1 = arith.constant 0 : index
    %0 = vector.load %arg1[%c0, %c0_0, %c0_1] : memref<2x8x32xf32, #tpu.memory_space<vmem>>, vector<2x8x32xf32>
    %1 = vector.shape_cast %0 : vector<2x8x32xf32> to vector<16x32xf32>
    %c0_2 = arith.constant 0 : index
    %c0_3 = arith.constant 0 : index
    %c0_4 = arith.constant 0 : index
    %2 = vector.load %arg2[%c0_2, %c0_3, %c0_4] : memref<2x16x32xf32, #tpu.memory_space<vmem>>, vector<2x16x32xf32>
    %3 = vector.shape_cast %2 : vector<2x16x32xf32> to vector<32x32xf32>
    %c0_5 = arith.constant 0 : index
    %c0_6 = arith.constant 0 : index
    %c0_7 = arith.constant 0 : index
    %4 = vector.load %arg3[%c0_5, %c0_6, %c0_7] : memref<2x8x128xf32, #tpu.memory_space<vmem>>, vector<2x8x128xf32>
    %5 = vector.shape_cast %4 : vector<2x8x128xf32> to vector<16x128xf32>
    %c0_8 = arith.constant 0 : index
    %c0_9 = arith.constant 0 : index
    %6 = vector.load %arg5[%c0_8, %c0_9] : memref<32x128xf32, #tpu.memory_space<vmem>>, vector<32x128xf32>
    %cst = arith.constant dense<0.000000e+00> : vector<32x128xf32>
    %7 = tpu.matmul %3, %6, %cst {dimension_numbers = #tpu.dot_dimension_numbers<[1], [0], [0], [1], [0, 0, 1, 1], [], []>} : vector<32x32xf32>, vector<32x128xf32>, vector<32x128xf32> -> vector<32x128xf32>
    %8 = vector.shape_cast %7 : vector<32x128xf32> to vector<2x16x128xf32>
    %c0_10 = arith.constant 0 : index
    %c0_11 = arith.constant 0 : index
    %c0_12 = arith.constant 0 : index
    %9 = vector.load %arg4[%c0_10, %c0_11, %c0_12] : memref<2x32x32xf32, #tpu.memory_space<vmem>>, vector<1x32x32xf32>
    %10 = vector.shape_cast %9 : vector<1x32x32xf32> to vector<32x32xf32>
    %cst_13 = arith.constant dense<0.000000e+00> : vector<16x32xf32>
    %11 = tpu.matmul %1, %10, %cst_13 {dimension_numbers = #tpu.dot_dimension_numbers<[1], [0], [0], [1], [0, 0, 1, 1], [], []>} : vector<16x32xf32>, vector<32x32xf32>, vector<16x32xf32> -> vector<16x32xf32>
    %cst_14 = arith.constant 0.176776692 : f32
    %12 = vector.broadcast %cst_14 : f32 to vector<16x32xf32>
    %13 = arith.mulf %11, %12 : vector<16x32xf32>
    %14 = vector.shape_cast %13 : vector<16x32xf32> to vector<2x8x32xf32>
    %15 = vector.extract_strided_slice %8 {offsets = [0, 0, 0], sizes = [2, 16, 32], strides = [1, 1, 1]} : vector<2x16x128xf32> to vector<2x16x32xf32>
    %16 = vector.extract_strided_slice %8 {offsets = [0, 0, 64], sizes = [2, 16, 32], strides = [1, 1, 1]} : vector<2x16x128xf32> to vector<2x16x32xf32>
    "tpu.trace_start"() <{level = 10 : i32, message = "bld,bsd->bls"}> : () -> ()
    %cst_15 = arith.constant dense<0.000000e+00> : vector<2x8x16xf32>
    %17 = tpu.matmul %14, %15, %cst_15 {dimension_numbers = #tpu.dot_dimension_numbers<[2], [2], [1], [1], [0, 0, 0, 1, 1, 1], [0], [0]>} : vector<2x8x32xf32>, vector<2x16x32xf32>, vector<2x8x16xf32> -> vector<2x8x16xf32>
    "tpu.trace_stop"() : () -> ()
    %cst_16 = arith.constant dense<0xFF800000> : vector<2x8xf32>
    %18 = vector.multi_reduction <maximumf>, %17, %cst_16 [2] : vector<2x8x16xf32> to vector<2x8xf32>
    %19 = vector.shape_cast %18 : vector<2x8xf32> to vector<2x8x1xf32>
    %20 = vector.broadcast %19 : vector<2x8x1xf32> to vector<2x8x16xf32>
    %21 = arith.subf %17, %20 : vector<2x8x16xf32>
    %22 = math.exp %21 : vector<2x8x16xf32>
    %cst_17 = arith.constant dense<0.000000e+00> : vector<2x8xf32>
    %23 = vector.multi_reduction <add>, %22, %cst_17 [2] : vector<2x8x16xf32> to vector<2x8xf32>
    %24 = vector.shape_cast %23 : vector<2x8xf32> to vector<2x8x1xf32>
    %25 = vector.broadcast %24 : vector<2x8x1xf32> to vector<2x8x16xf32>
    %26 = arith.divf %22, %25 : vector<2x8x16xf32>
    "tpu.trace_start"() <{level = 10 : i32, message = "bls,bsd->bld"}> : () -> ()
    %cst_18 = arith.constant dense<0.000000e+00> : vector<2x8x32xf32>
    %27 = tpu.matmul %26, %16, %cst_18 {dimension_numbers = #tpu.dot_dimension_numbers<[2], [1], [1], [2], [0, 0, 0, 1, 1, 2], [0], [0]>} : vector<2x8x16xf32>, vector<2x16x32xf32>, vector<2x8x32xf32> -> vector<2x8x32xf32>
    "tpu.trace_stop"() : () -> ()
    %28 = vector.shape_cast %27 : vector<2x8x32xf32> to vector<16x32xf32>
    %c0_19 = arith.constant 0 : index
    %c0_20 = arith.constant 0 : index
    %c0_21 = arith.constant 0 : index
    %29 = vector.load %arg6[%c0_19, %c0_20, %c0_21] : memref<2x32x32xf32, #tpu.memory_space<vmem>>, vector<1x32x32xf32>
    %30 = vector.shape_cast %29 : vector<1x32x32xf32> to vector<32x32xf32>
    %cst_22 = arith.constant dense<0.000000e+00> : vector<16x32xf32>
    %31 = tpu.matmul %28, %30, %cst_22 {dimension_numbers = #tpu.dot_dimension_numbers<[1], [0], [0], [1], [0, 0, 1, 1], [], []>} : vector<16x32xf32>, vector<32x32xf32>, vector<16x32xf32> -> vector<16x32xf32>
    %32 = arith.addf %1, %31 : vector<16x32xf32>
    %c0_23 = arith.constant 0 : index
    %c0_24 = arith.constant 0 : index
    %c0_25 = arith.constant 0 : index
    %33 = vector.load %arg7[%c0_23, %c0_24, %c0_25] : memref<2x32x128xf32, #tpu.memory_space<vmem>>, vector<1x32x128xf32>
    %34 = vector.shape_cast %33 : vector<1x32x128xf32> to vector<32x128xf32>
    %cst_26 = arith.constant dense<0.000000e+00> : vector<16x128xf32>
    %35 = tpu.matmul %32, %34, %cst_26 {dimension_numbers = #tpu.dot_dimension_numbers<[1], [0], [0], [1], [0, 0, 1, 1], [], []>} : vector<16x32xf32>, vector<32x128xf32>, vector<16x128xf32> -> vector<16x128xf32>
    %36 = arith.addf %5, %35 : vector<16x128xf32>
    %c1 = arith.constant 1 : index
    %c0_27 = arith.constant 0 : index
    %c0_28 = arith.constant 0 : index
    %37 = vector.load %arg4[%c1, %c0_27, %c0_28] : memref<2x32x32xf32, #tpu.memory_space<vmem>>, vector<1x32x32xf32>
    %38 = vector.shape_cast %37 : vector<1x32x32xf32> to vector<32x32xf32>
    %cst_29 = arith.constant dense<0.000000e+00> : vector<16x32xf32>
    %39 = tpu.matmul %32, %38, %cst_29 {dimension_numbers = #tpu.dot_dimension_numbers<[1], [0], [0], [1], [0, 0, 1, 1], [], []>} : vector<16x32xf32>, vector<32x32xf32>, vector<16x32xf32> -> vector<16x32xf32>
    %cst_30 = arith.constant 0.176776692 : f32
    %40 = vector.broadcast %cst_30 : f32 to vector<16x32xf32>
    %41 = arith.mulf %39, %40 : vector<16x32xf32>
    %42 = vector.shape_cast %41 : vector<16x32xf32> to vector<2x8x32xf32>
    %43 = vector.extract_strided_slice %8 {offsets = [0, 0, 32], sizes = [2, 16, 32], strides = [1, 1, 1]} : vector<2x16x128xf32> to vector<2x16x32xf32>
    %44 = vector.extract_strided_slice %8 {offsets = [0, 0, 96], sizes = [2, 16, 32], strides = [1, 1, 1]} : vector<2x16x128xf32> to vector<2x16x32xf32>
    "tpu.trace_start"() <{level = 10 : i32, message = "bld,bsd->bls"}> : () -> ()
    %cst_31 = arith.constant dense<0.000000e+00> : vector<2x8x16xf32>
    %45 = tpu.matmul %42, %43, %cst_31 {dimension_numbers = #tpu.dot_dimension_numbers<[2], [2], [1], [1], [0, 0, 0, 1, 1, 1], [0], [0]>} : vector<2x8x32xf32>, vector<2x16x32xf32>, vector<2x8x16xf32> -> vector<2x8x16xf32>
    "tpu.trace_stop"() : () -> ()
    %cst_32 = arith.constant dense<0xFF800000> : vector<2x8xf32>
    %46 = vector.multi_reduction <maximumf>, %45, %cst_32 [2] : vector<2x8x16xf32> to vector<2x8xf32>
    %47 = vector.shape_cast %46 : vector<2x8xf32> to vector<2x8x1xf32>
    %48 = vector.broadcast %47 : vector<2x8x1xf32> to vector<2x8x16xf32>
    %49 = arith.subf %45, %48 : vector<2x8x16xf32>
    %50 = math.exp %49 : vector<2x8x16xf32>
    %cst_33 = arith.constant dense<0.000000e+00> : vector<2x8xf32>
    %51 = vector.multi_reduction <add>, %50, %cst_33 [2] : vector<2x8x16xf32> to vector<2x8xf32>
    %52 = vector.shape_cast %51 : vector<2x8xf32> to vector<2x8x1xf32>
    %53 = vector.broadcast %52 : vector<2x8x1xf32> to vector<2x8x16xf32>
    %54 = arith.divf %50, %53 : vector<2x8x16xf32>
    "tpu.trace_start"() <{level = 10 : i32, message = "bls,bsd->bld"}> : () -> ()
    %cst_34 = arith.constant dense<0.000000e+00> : vector<2x8x32xf32>
    %55 = tpu.matmul %54, %44, %cst_34 {dimension_numbers = #tpu.dot_dimension_numbers<[2], [1], [1], [2], [0, 0, 0, 1, 1, 2], [0], [0]>} : vector<2x8x16xf32>, vector<2x16x32xf32>, vector<2x8x32xf32> -> vector<2x8x32xf32>
    "tpu.trace_stop"() : () -> ()
    %56 = vector.shape_cast %55 : vector<2x8x32xf32> to vector<16x32xf32>
    %c1_35 = arith.constant 1 : index
    %c0_36 = arith.constant 0 : index
    %c0_37 = arith.constant 0 : index
    %57 = vector.load %arg6[%c1_35, %c0_36, %c0_37] : memref<2x32x32xf32, #tpu.memory_space<vmem>>, vector<1x32x32xf32>
    %58 = vector.shape_cast %57 : vector<1x32x32xf32> to vector<32x32xf32>
    %cst_38 = arith.constant dense<0.000000e+00> : vector<16x32xf32>
    %59 = tpu.matmul %56, %58, %cst_38 {dimension_numbers = #tpu.dot_dimension_numbers<[1], [0], [0], [1], [0, 0, 1, 1], [], []>} : vector<16x32xf32>, vector<32x32xf32>, vector<16x32xf32> -> vector<16x32xf32>
    %60 = arith.addf %32, %59 : vector<16x32xf32>
    %c1_39 = arith.constant 1 : index
    %c0_40 = arith.constant 0 : index
    %c0_41 = arith.constant 0 : index
    %61 = vector.load %arg7[%c1_39, %c0_40, %c0_41] : memref<2x32x128xf32, #tpu.memory_space<vmem>>, vector<1x32x128xf32>
    %62 = vector.shape_cast %61 : vector<1x32x128xf32> to vector<32x128xf32>
    %cst_42 = arith.constant dense<0.000000e+00> : vector<16x128xf32>
    %63 = tpu.matmul %60, %62, %cst_42 {dimension_numbers = #tpu.dot_dimension_numbers<[1], [0], [0], [1], [0, 0, 1, 1], [], []>} : vector<16x32xf32>, vector<32x128xf32>, vector<16x128xf32> -> vector<16x128xf32>
    %64 = arith.addf %36, %63 : vector<16x128xf32>
    %c0_43 = arith.constant 0 : index
    %c0_44 = arith.constant 0 : index
    %65 = vector.load %arg8[%c0_43, %c0_44] : memref<2x32xf32, #tpu.memory_space<vmem>>, vector<1x32xf32>
    %c1_45 = arith.constant 1 : index
    %c0_46 = arith.constant 0 : index
    %66 = vector.load %arg8[%c1_45, %c0_46] : memref<2x32xf32, #tpu.memory_space<vmem>>, vector<1x32xf32>
    %cst_47 = arith.constant dense<0.000000e+00> : vector<16xf32>
    %67 = vector.multi_reduction <add>, %60, %cst_47 [1] : vector<16x32xf32> to vector<16xf32>
    %68 = vector.shape_cast %67 : vector<16xf32> to vector<16x1xf32>
    %cst_48 = arith.constant 3.200000e+01 : f32
    %69 = vector.broadcast %cst_48 : f32 to vector<16x1xf32>
    %70 = arith.divf %68, %69 : vector<16x1xf32>
    %71 = vector.broadcast %70 : vector<16x1xf32> to vector<16x32xf32>
    %72 = arith.subf %60, %71 : vector<16x32xf32>
    %73 = arith.mulf %72, %72 : vector<16x32xf32>
    %cst_49 = arith.constant dense<0.000000e+00> : vector<16xf32>
    %74 = vector.multi_reduction <add>, %73, %cst_49 [1] : vector<16x32xf32> to vector<16xf32>
    %75 = vector.shape_cast %74 : vector<16xf32> to vector<16x1xf32>
    %cst_50 = arith.constant 3.200000e+01 : f32
    %76 = vector.broadcast %cst_50 : f32 to vector<16x1xf32>
    %77 = arith.divf %75, %76 : vector<16x1xf32>
    %78 = vector.broadcast %70 : vector<16x1xf32> to vector<16x32xf32>
    %79 = arith.subf %60, %78 : vector<16x32xf32>
    %cst_51 = arith.constant 9.99999974E-6 : f32
    %80 = vector.broadcast %cst_51 : f32 to vector<16x1xf32>
    %81 = arith.addf %77, %80 : vector<16x1xf32>
    %82 = math.rsqrt %81 : vector<16x1xf32>
    %83 = vector.broadcast %82 : vector<16x1xf32> to vector<16x32xf32>
    %84 = arith.mulf %79, %83 : vector<16x32xf32>
    %85 = vector.broadcast %65 : vector<1x32xf32> to vector<16x32xf32>
    %86 = arith.mulf %84, %85 : vector<16x32xf32>
    %87 = vector.broadcast %66 : vector<1x32xf32> to vector<16x32xf32>
    %88 = arith.addf %86, %87 : vector<16x32xf32>
    %c0_52 = arith.constant 0 : index
    %c0_53 = arith.constant 0 : index
    %89 = vector.load %arg9[%c0_52, %c0_53] : memref<32x128xf32, #tpu.memory_space<vmem>>, vector<32x128xf32>
    %cst_54 = arith.constant dense<0.000000e+00> : vector<16x128xf32>
    %90 = tpu.matmul %88, %89, %cst_54 {dimension_numbers = #tpu.dot_dimension_numbers<[1], [0], [0], [1], [0, 0, 1, 1], [], []>} : vector<16x32xf32>, vector<32x128xf32>, vector<16x128xf32> -> vector<16x128xf32>
    %c0_55 = arith.constant 0 : index
    %c0_56 = arith.constant 0 : index
    %91 = vector.load %arg10[%c0_55, %c0_56] : memref<1x128xf32, #tpu.memory_space<vmem>>, vector<1x128xf32>
    %92 = vector.broadcast %91 : vector<1x128xf32> to vector<16x128xf32>
    %93 = arith.addf %90, %92 : vector<16x128xf32>
    %94 = vector.shape_cast %93 : vector<16x128xf32> to vector<2x8x128xf32>
    %c0_57 = arith.constant 0 : index
    %c0_58 = arith.constant 0 : index
    %c0_59 = arith.constant 0 : index
    %95 = vector.load %arg11[%c0_57, %c0_58, %c0_59] : memref<2x8x128xf32, #tpu.memory_space<vmem>>, vector<2x8x128xf32>
    tpu.vector_store %arg11[%c0_57, %c0_58, %c0_59], %94 {strides = array<i32>} : memref<2x8x128xf32, #tpu.memory_space<vmem>>, vector<2x8x128xf32>,
    %96 = vector.shape_cast %64 : vector<16x128xf32> to vector<2x8x128xf32>
    %c0_60 = arith.constant 0 : index
    %c0_61 = arith.constant 0 : index
    %c0_62 = arith.constant 0 : index
    %97 = vector.load %arg12[%c0_60, %c0_61, %c0_62] : memref<2x8x128xf32, #tpu.memory_space<vmem>>, vector<2x8x128xf32>
    tpu.vector_store %arg12[%c0_60, %c0_61, %c0_62], %96 {strides = array<i32>} : memref<2x8x128xf32, #tpu.memory_space<vmem>>, vector<2x8x128xf32>,
    return
  }
  func.func @transform_0(%arg0: i32) -> (i32, i32, i32) {
    %c0_i32 = arith.constant 0 : i32
    %c0_i32_0 = arith.constant 0 : i32
    %c0_i32_1 = arith.constant 0 : i32
    return %arg0, %c0_i32, %c0_i32_0 : i32, i32, i32
  }
  func.func @transform_1(%arg0: i32) -> (i32, i32, i32) {
    %c0_i32 = arith.constant 0 : i32
    %c0_i32_0 = arith.constant 0 : i32
    %c0_i32_1 = arith.constant 0 : i32
    return %arg0, %c0_i32, %c0_i32_0 : i32, i32, i32
  }
  func.func @transform_2(%arg0: i32) -> (i32, i32, i32) {
    %c0_i32 = arith.constant 0 : i32
    %c0_i32_0 = arith.constant 0 : i32
    %c0_i32_1 = arith.constant 0 : i32
    return %arg0, %c0_i32, %c0_i32_0 : i32, i32, i32
  }
  func.func @transform_3(%arg0: i32) -> (i32, i32, i32) {
    %c0_i32 = arith.constant 0 : i32
    %c0_i32_0 = arith.constant 0 : i32
    %c0_i32_1 = arith.constant 0 : i32
    %c0_i32_2 = arith.constant 0 : i32
    return %c0_i32, %c0_i32_0, %c0_i32_1 : i32, i32, i32
  }
  func.func @transform_4(%arg0: i32) -> (i32, i32) {
    %c0_i32 = arith.constant 0 : i32
    %c0_i32_0 = arith.constant 0 : i32
    %c0_i32_1 = arith.constant 0 : i32
    return %c0_i32, %c0_i32_0 : i32, i32
  }
  func.func @transform_5(%arg0: i32) -> (i32, i32, i32) {
    %c0_i32 = arith.constant 0 : i32
    %c0_i32_0 = arith.constant 0 : i32
    %c0_i32_1 = arith.constant 0 : i32
    %c0_i32_2 = arith.constant 0 : i32
    return %c0_i32, %c0_i32_0, %c0_i32_1 : i32, i32, i32
  }
  func.func @transform_6(%arg0: i32) -> (i32, i32, i32) {
    %c0_i32 = arith.constant 0 : i32
    %c0_i32_0 = arith.constant 0 : i32
    %c0_i32_1 = arith.constant 0 : i32
    %c0_i32_2 = arith.constant 0 : i32
    return %c0_i32, %c0_i32_0, %c0_i32_1 : i32, i32, i32
  }
  func.func @transform_7(%arg0: i32) -> (i32, i32) {
    %c0_i32 = arith.constant 0 : i32
    %c0_i32_0 = arith.constant 0 : i32
    %c0_i32_1 = arith.constant 0 : i32
    return %c0_i32, %c0_i32_0 : i32, i32
  }
  func.func @transform_8(%arg0: i32) -> (i32, i32) {
    %c0_i32 = arith.constant 0 : i32
    %c0_i32_0 = arith.constant 0 : i32
    %c0_i32_1 = arith.constant 0 : i32
    return %c0_i32, %c0_i32_0 : i32, i32
  }
  func.func @transform_9(%arg0: i32) -> (i32, i32) {
    %c0_i32 = arith.constant 0 : i32
    %c0_i32_0 = arith.constant 0 : i32
    %c0_i32_1 = arith.constant 0 : i32
    return %c0_i32, %c0_i32_0 : i32, i32
  }
  func.func @transform_10(%arg0: i32) -> (i32, i32, i32) {
    %c0_i32 = arith.constant 0 : i32
    %c0_i32_0 = arith.constant 0 : i32
    %c0_i32_1 = arith.constant 0 : i32
    return %arg0, %c0_i32, %c0_i32_0 : i32, i32, i32
  }
  func.func @transform_11(%arg0: i32) -> (i32, i32, i32) {
    %c0_i32 = arith.constant 0 : i32
    %c0_i32_0 = arith.constant 0 : i32
    %c0_i32_1 = arith.constant 0 : i32
    return %arg0, %c0_i32, %c0_i32_0 : i32, i32, i32
  }
}

</mosaic_0001>

<llo_original>
// kernel: tpu_custom_call.1
$region0: #{tpu_custom_call.1}
  #allocation0 [shape = 'u32[]', space=smem, size = 0x4, offset = 0x4, fixed_abs, tag = 'smem constant byte address 0x4 - core index']
  #allocation1 [shape = 'u32[144,128]{1,0:T(1,128)}', space=vmem, size = 0x12000, scoped, tag = 'internal scratch']
  %s0 = inlined_call_operand.vmem [shape: f32[2,8,32], index: 0, kind: input, shape index: {}]
  %s1 = inlined_call_operand.vmem [shape: f32[2,16,32], index: 1, kind: input, shape index: {}]
  %s2 = inlined_call_operand.hbm [shape: f32[2,8,128], index: 2, kind: input, shape index: {}, may-alias: {2,11}]
  %s3 = inlined_call_operand.hbm [shape: f32[2,32,32], index: 3, kind: input, shape index: {}]
  %s4 = inlined_call_operand.hbm [shape: f32[32,128], index: 4, kind: input, shape index: {}]
  %s5 = inlined_call_operand.hbm [shape: f32[2,32,32], index: 5, kind: input, shape index: {}]
  %s6 = inlined_call_operand.hbm [shape: f32[2,32,128], index: 6, kind: input, shape index: {}]
  %s7 = inlined_call_operand.vmem [shape: f32[2,32], index: 7, kind: input, shape index: {}]
  %s8 = inlined_call_operand.hbm [shape: f32[32,128], index: 8, kind: input, shape index: {}]
  %s9 = inlined_call_operand.vmem [shape: f32[1,128], index: 9, kind: input, shape index: {}]
  %s10 = inlined_call_operand.hbm [shape: f32[2,8,128], index: 10, kind: output, shape index: {0}]
  %s11 = inlined_call_operand.hbm [shape: f32[2,8,128], index: 11, kind: output, shape index: {1}, may-alias: {2,11}]
  %12 = xla_tuple %s10, %s11
  %s13 = sld [smem:[#allocation0]]
  $region82: #{tpu_custom_call.1} parent=0
    _
  %s15 = ssub.s32 1, %s13
  %s16 = scalar_select 0, %s15, %s13
  $region1: #{tpu_custom_call.1} parent=0
    #allocation2 [shape = 'u8[8192]{0}', space=vmem, size = 0x2000, scoped, tag = 'input window, operand 2, single buffered']
    #allocation3 [shape = 's32[1]{0}', space=sflag, size = 0x4, scoped, tag = 'scoped memory for tpu_custom_call.1']
    #allocation4 [shape = 's32[1]{0}', space=sflag, size = 0x4, scoped, tag = 'scoped memory for tpu_custom_call.1']
    #allocation5 [shape = 'u8[32768]{0}', space=vmem, size = 0x8000, scoped, tag = 'input window, operand 3, single buffered']
    #allocation6 [shape = 's32[1]{0}', space=sflag, size = 0x4, scoped, tag = 'scoped memory for tpu_custom_call.1']
    #allocation7 [shape = 'u8[16384]{0}', space=vmem, size = 0x4000, scoped, tag = 'input window, operand 4, single buffered']
    #allocation8 [shape = 'u8[32768]{0}', space=vmem, size = 0x8000, scoped, tag = 'input window, operand 5, single buffered']
    #allocation9 [shape = 's32[1]{0}', space=sflag, size = 0x4, scoped, tag = 'scoped memory for tpu_custom_call.1']
    #allocation10 [shape = 'u8[32768]{0}', space=vmem, size = 0x8000, scoped, tag = 'input window, operand 6, single buffered']
    #allocation11 [shape = 'u8[16384]{0}', space=vmem, size = 0x4000, scoped, tag = 'input window, operand 8, single buffered']
    #allocation12 [shape = 's32[1]{0}', space=sflag, size = 0x4, scoped, tag = 'scoped memory for tpu_custom_call.1']
    #allocation13 [shape = 'u8[8192]{0}', space=vmem, size = 0x2000, scoped, tag = 'output window, operand 0, single buffered']
    #allocation14 [shape = 'u8[8192]{0}', space=vmem, size = 0x2000, scoped, tag = 'output window, operand 1, single buffered']
    #allocation15 [shape = 's32[1]{0}', space=sflag, size = 0x4, scoped, tag = 'scoped memory for tpu_custom_call.1']
    %17 = vsyncpa [#allocation3], 0
    %18 = vsyncpa [#allocation6], 0
    %19 = vsyncpa [#allocation9], 0
    %20 = vsyncpa [#allocation12], 0
    %21 = vsyncpa [#allocation4], 0
    %22 = vsyncpa [#allocation15], 0
    // Predicated region
    $region2: #{tpu_custom_call.1} parent=1 // pred_check
      _
    $region3: #{tpu_custom_call.1} parent=1 // pred_check_branch
      %24 = sbr.rel (0) target = $region5
    $region4: #{tpu_custom_call.1} parent=1 // pred_region
      _
    $region5: #{tpu_custom_call.1} parent=1 // pred_fallthru
      _
    // Predicated region
    $region6: #{tpu_custom_call.1} parent=1 // pred_check
      _
    $region7: #{tpu_custom_call.1} parent=1 // pred_check_branch
      %26 = sbr.rel (0) target = $region9
    $region8: #{tpu_custom_call.1} parent=1 // pred_region
      _
    $region9: #{tpu_custom_call.1} parent=1 // pred_fallthru
      _
    // Predicated region
    $region10: #{tpu_custom_call.1} parent=1 // pred_check
      _
    $region11: #{tpu_custom_call.1} parent=1 // pred_check_branch
      %28 = sbr.rel (0) target = $region13
    $region12: #{tpu_custom_call.1} parent=1 // pred_region
      %s30 = ssub.s32 256, 256
      %31 = vsyncadd [#allocation3], %s30
      %s32 = sshll.u32 [#allocation2], 4
      %s33 = int_to_ptr.vmem [resolvable:$true] %s32
      %38 = dma.hbm_to_vmem [thread:$0]  %s2, 256, %s33, [#allocation3], 128, 128, 8
    $region13: #{tpu_custom_call.1} parent=1 // pred_fallthru
      _
    // Predicated region
    $region14: #{tpu_custom_call.1} parent=1 // pred_check
      _
    $region15: #{tpu_custom_call.1} parent=1 // pred_check_branch
      %40 = sbr.rel (0) target = $region17
    $region16: #{tpu_custom_call.1} parent=1 // pred_region
      %s42 = ssub.s32 1024, 1024
      %43 = vsyncadd [#allocation6], %s42
      %s44 = sshll.u32 [#allocation5], 4
      %s45 = int_to_ptr.vmem [resolvable:$true] %s44
      %50 = dma.hbm_to_vmem [thread:$0]  %s3, 1024, %s45, [#allocation6], 128, 128, 8
    $region17: #{tpu_custom_call.1} parent=1 // pred_fallthru
      _
    // Predicated region
    $region18: #{tpu_custom_call.1} parent=1 // pred_check
      _
    $region19: #{tpu_custom_call.1} parent=1 // pred_check_branch
      %52 = sbr.rel (0) target = $region21
    $region20: #{tpu_custom_call.1} parent=1 // pred_region
      %s54 = ssub.s32 512, 512
      %55 = vsyncadd [#allocation6], %s54
      %s56 = sshll.u32 [#allocation7], 4
      %s57 = int_to_ptr.vmem [resolvable:$true] %s56
      %62 = dma.hbm_to_vmem [thread:$0]  %s4, 512, %s57, [#allocation6], 128, 128, 8
    $region21: #{tpu_custom_call.1} parent=1 // pred_fallthru
      _
    // Predicated region
    $region22: #{tpu_custom_call.1} parent=1 // pred_check
      _
    $region23: #{tpu_custom_call.1} parent=1 // pred_check_branch
      %64 = sbr.rel (0) target = $region25
    $region24: #{tpu_custom_call.1} parent=1 // pred_region
      %s66 = ssub.s32 1024, 1024
      %67 = vsyncadd [#allocation9], %s66
      %s68 = sshll.u32 [#allocation8], 4
      %s69 = int_to_ptr.vmem [resolvable:$true] %s68
      %74 = dma.hbm_to_vmem [thread:$0]  %s5, 1024, %s69, [#allocation9], 128, 128, 8
    $region25: #{tpu_custom_call.1} parent=1 // pred_fallthru
      _
    // Predicated region
    $region26: #{tpu_custom_call.1} parent=1 // pred_check
      _
    $region27: #{tpu_custom_call.1} parent=1 // pred_check_branch
      %76 = sbr.rel (0) target = $region29
    $region28: #{tpu_custom_call.1} parent=1 // pred_region
      %s78 = ssub.s32 1024, 1024
      %79 = vsyncadd [#allocation9], %s78
      %s80 = sshll.u32 [#allocation10], 4
      %s81 = int_to_ptr.vmem [resolvable:$true] %s80
      %86 = dma.hbm_to_vmem [thread:$0]  %s6, 1024, %s81, [#allocation9], 128, 128, 8
    $region29: #{tpu_custom_call.1} parent=1 // pred_fallthru
      _
    // Predicated region
    $region30: #{tpu_custom_call.1} parent=1 // pred_check
      _
    $region31: #{tpu_custom_call.1} parent=1 // pred_check_branch
      %88 = sbr.rel (0) target = $region33
    $region32: #{tpu_custom_call.1} parent=1 // pred_region
      _
    $region33: #{tpu_custom_call.1} parent=1 // pred_fallthru
      _
    // Predicated region
    $region34: #{tpu_custom_call.1} parent=1 // pred_check
      _
    $region35: #{tpu_custom_call.1} parent=1 // pred_check_branch
      %90 = sbr.rel (0) target = $region37
    $region36: #{tpu_custom_call.1} parent=1 // pred_region
      %s92 = ssub.s32 512, 512
      %93 = vsyncadd [#allocation12], %s92
      %s94 = sshll.u32 [#allocation11], 4
      %s95 = int_to_ptr.vmem [resolvable:$true] %s94
      %100 = dma.hbm_to_vmem [thread:$0]  %s8, 512, %s95, [#allocation12], 128, 128, 8
    $region37: #{tpu_custom_call.1} parent=1 // pred_fallthru
      _
    // Predicated region
    $region38: #{tpu_custom_call.1} parent=1 // pred_check
      _
    $region39: #{tpu_custom_call.1} parent=1 // pred_check_branch
      %102 = sbr.rel (0) target = $region41
    $region40: #{tpu_custom_call.1} parent=1 // pred_region
      _
    $region41: #{tpu_custom_call.1} parent=1 // pred_fallthru
      _
    // Predicated region
    $region42: #{tpu_custom_call.1} parent=1 // pred_check
      _
    $region43: #{tpu_custom_call.1} parent=1 // pred_check_branch
      %104 = sbr.rel (0) target = $region45
    $region44: #{tpu_custom_call.1} parent=1 // pred_region
      %105 = dma.done [#allocation3], 256
    $region45: #{tpu_custom_call.1} parent=1 // pred_fallthru
      _
    // Predicated region
    $region46: #{tpu_custom_call.1} parent=1 // pred_check
      _
    $region47: #{tpu_custom_call.1} parent=1 // pred_check_branch
      %107 = sbr.rel (0) target = $region49
    $region48: #{tpu_custom_call.1} parent=1 // pred_region
      %108 = dma.done [#allocation6], 1024
    $region49: #{tpu_custom_call.1} parent=1 // pred_fallthru
      _
    // Predicated region
    $region50: #{tpu_custom_call.1} parent=1 // pred_check
      _
    $region51: #{tpu_custom_call.1} parent=1 // pred_check_branch
      %110 = sbr.rel (0) target = $region53
    $region52: #{tpu_custom_call.1} parent=1 // pred_region
      %111 = dma.done [#allocation6], 512
    $region53: #{tpu_custom_call.1} parent=1 // pred_fallthru
      _
    // Predicated region
    $region54: #{tpu_custom_call.1} parent=1 // pred_check
      _
    $region55: #{tpu_custom_call.1} parent=1 // pred_check_branch
      %113 = sbr.rel (0) target = $region57
    $region56: #{tpu_custom_call.1} parent=1 // pred_region
      %114 = dma.done [#allocation9], 1024
    $region57: #{tpu_custom_call.1} parent=1 // pred_fallthru
      _
    // Predicated region
    $region58: #{tpu_custom_call.1} parent=1 // pred_check
      _
    $region59: #{tpu_custom_call.1} parent=1 // pred_check_branch
      %116 = sbr.rel (0) target = $region61
    $region60: #{tpu_custom_call.1} parent=1 // pred_region
      %117 = dma.done [#allocation9], 1024
    $region61: #{tpu_custom_call.1} parent=1 // pred_fallthru
      _
    // Predicated region
    $region62: #{tpu_custom_call.1} parent=1 // pred_check
      _
    $region63: #{tpu_custom_call.1} parent=1 // pred_check_branch
      %119 = sbr.rel (0) target = $region65
    $region64: #{tpu_custom_call.1} parent=1 // pred_region
      %120 = dma.done [#allocation12], 512
    $region65: #{tpu_custom_call.1} parent=1 // pred_fallthru
      _
    %v121 = vld [vmem:[%s0] sm:$0xff]
    %v122 = vld [vmem:[%s0 + $0x8] sm:$0xff]
    %v123 = vld [vmem:[%s1] sm:$0xff]
    %v124 = vld [vmem:[%s1 + $0x8] sm:$0xff]
    %v125 = vld [vmem:[%s1 + $0x10] sm:$0xff]
    %v126 = vld [vmem:[%s1 + $0x18] sm:$0xff]
    %v127 = vld [vmem:[#allocation2] sm:$0xff]
    %v128 = vld [vmem:[#allocation2 + $0x8] sm:$0xff]
    %v129 = vld [vmem:[#allocation7] sm:$0xff]
    %v130 = vld [vmem:[#allocation7 + $0x8] sm:$0xff]
    %v131 = vld [vmem:[#allocation7 + $0x10] sm:$0xff]
    %v132 = vld [vmem:[#allocation7 + $0x18] sm:$0xff]
    %vm133 = vcmask 261120
    %v135 = vsel %vm133, %v123, 0
    %v138 = vsel %vm133, %v124, 0
    %v141 = vsel %vm133, %v125, 0
    %v144 = vsel %vm133, %v126, 0
    %146 = vmatprep.subr.mxu0 0.0
    %147 = vmatpush1.msra.mxu0 %v129
    %148 = vmatprep.subr.mxu0 0.0
    %149 = vmatpush1.msra.mxu0 %v130
    %150 = vmatprep.subr.mxu0 0.0
    %151 = vmatpush1.msra.mxu0 %v131
    %152 = vmatprep.subr.mxu0 0.0
    %153 = vmatpush1.msra.mxu0 %v132
    %154 = vmatprep.subr.mxu0 0.0
    %155 = vmatpush1.msra.mxu0 0.0
    %156 = vmatprep.subr.mxu0 0.0
    %157 = vmatpush1.msra.mxu0 0.0
    %158 = vmatprep.subr.mxu0 0.0
    %159 = vmatpush1.msra.mxu0 0.0
    %160 = vmatprep.subr.mxu0 0.0
    %161 = vmatpush1.msra.mxu0 0.0
    %162 = vmatprep.subr.mxu0 0.0
    %163 = vmatpush1.msra.mxu0 0.0
    %164 = vmatprep.subr.mxu0 0.0
    %165 = vmatpush1.msra.mxu0 0.0
    %166 = vmatprep.subr.mxu0 0.0
    %167 = vmatpush1.msra.mxu0 0.0
    %168 = vmatprep.subr.mxu0 0.0
    %169 = vmatpush1.msra.mxu0 0.0
    %170 = vmatprep.subr.mxu0 0.0
    %171 = vmatpush1.msra.mxu0 0.0
    %172 = vmatprep.subr.mxu0 0.0
    %173 = vmatpush1.msra.mxu0 0.0
    %174 = vmatprep.subr.mxu0 0.0
    %175 = vmatpush1.msra.mxu0 0.0
    %176 = vmatprep.subr.mxu0 0.0
    %177 = vmatpush1.msra.mxu0 0.0
    %178 = vmatprep.subr.mxu0 0.0
    %179 = vmatpush1.msra.mxu0 0.0
    %180 = vmatprep.subr.mxu0 0.0
    %181 = vmatpush1.msra.mxu0 0.0
    %182 = vmatprep.subr.mxu0 0.0
    %183 = vmatpush1.msra.mxu0 0.0
    %184 = vmatprep.subr.mxu0 0.0
    %185 = vmatpush1.msra.mxu0 0.0
    %186 = vmatprep.subr.mxu0 0.0
    %187 = vmatpush1.msra.mxu0 0.0
    %188 = vmatprep.subr.mxu0 0.0
    %189 = vmatpush1.msra.mxu0 0.0
    %190 = vmatprep.subr.mxu0 0.0
    %191 = vmatpush1.msra.mxu0 0.0
    %192 = vmatprep.subr.mxu0 0.0
    %193 = vmatpush1.msra.mxu0 0.0
    %194 = vmatprep.subr.mxu0 0.0
    %195 = vmatpush1.msra.mxu0 0.0
    %196 = vmatprep.subr.mxu0 0.0
    %197 = vmatpush1.msra.mxu0 0.0
    %198 = vmatprep.subr.mxu0 0.0
    %199 = vmatpush1.msra.mxu0 0.0
    %200 = vmatprep.subr.mxu0 0.0
    %201 = vmatpush1.msra.mxu0 0.0
    %202 = vmatprep.subr.mxu0 0.0
    %203 = vmatpush1.msra.mxu0 0.0
    %204 = vmatprep.subr.mxu0 0.0
    %205 = vmatpush1.msra.mxu0 0.0
    %206 = vmatprep.subr.mxu0 0.0
    %207 = vmatpush1.msra.mxu0 0.0
    %208 = vmatprep.subr.mxu0 0.0
    %209 = vmatpush1.msra.mxu0 0.0
    %210 = vmatprep.mubr.f32.mxu0 0.0
    %211 = vmatmul.mubr.f32.gmra.mrb[0].mxu0 %v135
    %v212 = vpop.f32.mrb[0].mxu0
    %v213 = vadd.f32 0.0, %v212
    %v214 = vpop.f32.mrb[0].mxu0
    %215 = vmatprep.mubr.f32.mxu0 0.0
    %216 = vmatmul.mubr.f32.gmra.mrb[0].mxu0 %v138
    %v217 = vpop.f32.mrb[0].mxu0
    %v218 = vadd.f32 0.0, %v217
    %v219 = vpop.f32.mrb[0].mxu0
    %220 = vmatprep.mubr.f32.mxu0 0.0
    %221 = vmatmul.mubr.f32.gmra.mrb[0].mxu0 %v141
    %v222 = vpop.f32.mrb[0].mxu0
    %v223 = vadd.f32 0.0, %v222
    %v224 = vpop.f32.mrb[0].mxu0
    %225 = vmatprep.mubr.f32.mxu0 0.0
    %226 = vmatmul.mubr.f32.gmra.mrb[0].mxu0 %v144
    %v227 = vpop.f32.mrb[0].mxu0
    %v228 = vadd.f32 0.0, %v227
    %v229 = vpop.f32.mrb[0].mxu0
    %230 = vdwg.mxu0
    %v231 = vld [vmem:[#allocation5] sm:$0xff]
    %v232 = vld [vmem:[#allocation5 + $0x8] sm:$0xff]
    %v233 = vld [vmem:[#allocation5 + $0x10] sm:$0xff]
    %v234 = vld [vmem:[#allocation5 + $0x18] sm:$0xff]
    %v236 = vsel %vm133, %v121, 0
    %v239 = vsel %vm133, %v122, 0
    %241 = vmatprep.subr.mxu0 0.0
    %242 = vmatpush1.msra.mxu0 %v231
    %243 = vmatprep.subr.mxu0 0.0
    %244 = vmatpush1.msra.mxu0 %v232
    %245 = vmatprep.subr.mxu0 0.0
    %246 = vmatpush1.msra.mxu0 %v233
    %247 = vmatprep.subr.mxu0 0.0
    %248 = vmatpush1.msra.mxu0 %v234
    %249 = vmatprep.subr.mxu0 0.0
    %250 = vmatpush1.msra.mxu0 0.0
    %251 = vmatprep.subr.mxu0 0.0
    %252 = vmatpush1.msra.mxu0 0.0
    %253 = vmatprep.subr.mxu0 0.0
    %254 = vmatpush1.msra.mxu0 0.0
    %255 = vmatprep.subr.mxu0 0.0
    %256 = vmatpush1.msra.mxu0 0.0
    %257 = vmatprep.subr.mxu0 0.0
    %258 = vmatpush1.msra.mxu0 0.0
    %259 = vmatprep.subr.mxu0 0.0
    %260 = vmatpush1.msra.mxu0 0.0
    %261 = vmatprep.subr.mxu0 0.0
    %262 = vmatpush1.msra.mxu0 0.0
    %263 = vmatprep.subr.mxu0 0.0
    %264 = vmatpush1.msra.mxu0 0.0
    %265 = vmatprep.subr.mxu0 0.0
    %266 = vmatpush1.msra.mxu0 0.0
    %267 = vmatprep.subr.mxu0 0.0
    %268 = vmatpush1.msra.mxu0 0.0
    %269 = vmatprep.subr.mxu0 0.0
    %270 = vmatpush1.msra.mxu0 0.0
    %271 = vmatprep.subr.mxu0 0.0
    %272 = vmatpush1.msra.mxu0 0.0
    %273 = vmatprep.subr.mxu0 0.0
    %274 = vmatpush1.msra.mxu0 0.0
    %275 = vmatprep.subr.mxu0 0.0
    %276 = vmatpush1.msra.mxu0 0.0
    %277 = vmatprep.subr.mxu0 0.0
    %278 = vmatpush1.msra.mxu0 0.0
    %279 = vmatprep.subr.mxu0 0.0
    %280 = vmatpush1.msra.mxu0 0.0
    %281 = vmatprep.subr.mxu0 0.0
    %282 = vmatpush1.msra.mxu0 0.0
    %283 = vmatprep.subr.mxu0 0.0
    %284 = vmatpush1.msra.mxu0 0.0
    %285 = vmatprep.subr.mxu0 0.0
    %286 = vmatpush1.msra.mxu0 0.0
    %287 = vmatprep.subr.mxu0 0.0
    %288 = vmatpush1.msra.mxu0 0.0
    %289 = vmatprep.subr.mxu0 0.0
    %290 = vmatpush1.msra.mxu0 0.0
    %291 = vmatprep.subr.mxu0 0.0
    %292 = vmatpush1.msra.mxu0 0.0
    %293 = vmatprep.subr.mxu0 0.0
    %294 = vmatpush1.msra.mxu0 0.0
    %295 = vmatprep.subr.mxu0 0.0
    %296 = vmatpush1.msra.mxu0 0.0
    %297 = vmatprep.subr.mxu0 0.0
    %298 = vmatpush1.msra.mxu0 0.0
    %299 = vmatprep.subr.mxu0 0.0
    %300 = vmatpush1.msra.mxu0 0.0
    %301 = vmatprep.subr.mxu0 0.0
    %302 = vmatpush1.msra.mxu0 0.0
    %303 = vmatprep.subr.mxu0 0.0
    %304 = vmatpush1.msra.mxu0 0.0
    %305 = vmatprep.mubr.f32.mxu0 0.0
    %306 = vmatmul.mubr.f32.gmra.mrb[0].mxu0 %v236
    %v307 = vpop.f32.mrb[0].mxu0
    %v308 = vadd.f32 0.0, %v307
    %v309 = vpop.f32.mrb[0].mxu0
    %310 = vmatprep.mubr.f32.mxu0 0.0
    %311 = vmatmul.mubr.f32.gmra.mrb[0].mxu0 %v239
    %v312 = vpop.f32.mrb[0].mxu0
    %v313 = vadd.f32 0.0, %v312
    %v314 = vpop.f32.mrb[0].mxu0
    %315 = vdwg.mxu0
    %v316 = vmul.f32 %v308, 0.17677669
    %v317 = vmul.f32 %v313, 0.17677669
    %v319 = vsel %vm133, %v316, 0
    %v322 = vsel %vm133, %v213, 0
    %v325 = vsel %vm133, %v218, 0
    %327 = vmatprep.subr.mxu0 0.0
    %328 = vmatpush1.xpose.msra.mxu0 %v322
    %329 = vmatprep.subr.mxu0 0.0
    %330 = vmatpush1.xpose.msra.mxu0 %v325
    %331 = vmatprep.subr.mxu0 0.0
    %332 = vmatpush1.xpose.msra.mxu0 0.0
    %333 = vmatprep.subr.mxu0 0.0
    %334 = vmatpush1.xpose.msra.mxu0 0.0
    %335 = vmatprep.subr.mxu0 0.0
    %336 = vmatpush1.xpose.msra.mxu0 0.0
    %337 = vmatprep.subr.mxu0 0.0
    %338 = vmatpush1.xpose.msra.mxu0 0.0
    %339 = vmatprep.subr.mxu0 0.0
    %340 = vmatpush1.xpose.msra.mxu0 0.0
    %341 = vmatprep.subr.mxu0 0.0
    %342 = vmatpush1.xpose.msra.mxu0 0.0
    %343 = vmatprep.subr.mxu0 0.0
    %344 = vmatpush1.xpose.msra.mxu0 0.0
    %345 = vmatprep.subr.mxu0 0.0
    %346 = vmatpush1.xpose.msra.mxu0 0.0
    %347 = vmatprep.subr.mxu0 0.0
    %348 = vmatpush1.xpose.msra.mxu0 0.0
    %349 = vmatprep.subr.mxu0 0.0
    %350 = vmatpush1.xpose.msra.mxu0 0.0
    %351 = vmatprep.subr.mxu0 0.0
    %352 = vmatpush1.xpose.msra.mxu0 0.0
    %353 = vmatprep.subr.mxu0 0.0
    %354 = vmatpush1.xpose.msra.mxu0 0.0
    %355 = vmatprep.subr.mxu0 0.0
    %356 = vmatpush1.xpose.msra.mxu0 0.0
    %357 = vmatprep.subr.mxu0 0.0
    %358 = vmatpush1.xpose.msra.mxu0 0.0
    %359 = vmatprep.subr.mxu0 0.0
    %360 = vmatpush1.xpose.msra.mxu0 0.0
    %361 = vmatprep.subr.mxu0 0.0
    %362 = vmatpush1.xpose.msra.mxu0 0.0
    %363 = vmatprep.subr.mxu0 0.0
    %364 = vmatpush1.xpose.msra.mxu0 0.0
    %365 = vmatprep.subr.mxu0 0.0
    %366 = vmatpush1.xpose.msra.mxu0 0.0
    %367 = vmatprep.subr.mxu0 0.0
    %368 = vmatpush1.xpose.msra.mxu0 0.0
    %369 = vmatprep.subr.mxu0 0.0
    %370 = vmatpush1.xpose.msra.mxu0 0.0
    %371 = vmatprep.subr.mxu0 0.0
    %372 = vmatpush1.xpose.msra.mxu0 0.0
    %373 = vmatprep.subr.mxu0 0.0
    %374 = vmatpush1.xpose.msra.mxu0 0.0
    %375 = vmatprep.subr.mxu0 0.0
    %376 = vmatpush1.xpose.msra.mxu0 0.0
    %377 = vmatprep.subr.mxu0 0.0
    %378 = vmatpush1.xpose.msra.mxu0 0.0
    %379 = vmatprep.subr.mxu0 0.0
    %380 = vmatpush1.xpose.msra.mxu0 0.0
    %381 = vmatprep.subr.mxu0 0.0
    %382 = vmatpush1.xpose.msra.mxu0 0.0
    %383 = vmatprep.subr.mxu0 0.0
    %384 = vmatpush1.xpose.msra.mxu0 0.0
    %385 = vmatprep.subr.mxu0 0.0
    %386 = vmatpush1.xpose.msra.mxu0 0.0
    %387 = vmatprep.subr.mxu0 0.0
    %388 = vmatpush1.xpose.msra.mxu0 0.0
    %389 = vmatprep.subr.mxu0 0.0
    %390 = vmatpush1.xpose.msra.mxu0 0.0
    %391 = vmatprep.mubr.f32.mxu0 0.0
    %392 = vmatmul.mubr.f32.gmra.mrb[0].mxu0 %v319
    %v393 = vpop.f32.mrb[0].mxu0
    %v394 = vadd.f32 0.0, %v393
    %v395 = vpop.f32.mrb[0].mxu0
    %396 = vdwg.mxu0
    %v398 = vsel %vm133, %v317, 0
    %v401 = vsel %vm133, %v223, 0
    %v404 = vsel %vm133, %v228, 0
    %406 = vmatprep.subr.mxu0 0.0
    %407 = vmatpush1.xpose.msra.mxu0 %v401
    %408 = vmatprep.subr.mxu0 0.0
    %409 = vmatpush1.xpose.msra.mxu0 %v404
    %410 = vmatprep.subr.mxu0 0.0
    %411 = vmatpush1.xpose.msra.mxu0 0.0
    %412 = vmatprep.subr.mxu0 0.0
    %413 = vmatpush1.xpose.msra.mxu0 0.0
    %414 = vmatprep.subr.mxu0 0.0
    %415 = vmatpush1.xpose.msra.mxu0 0.0
    %416 = vmatprep.subr.mxu0 0.0
    %417 = vmatpush1.xpose.msra.mxu0 0.0
    %418 = vmatprep.subr.mxu0 0.0
    %419 = vmatpush1.xpose.msra.mxu0 0.0
    %420 = vmatprep.subr.mxu0 0.0
    %421 = vmatpush1.xpose.msra.mxu0 0.0
    %422 = vmatprep.subr.mxu0 0.0
    %423 = vmatpush1.xpose.msra.mxu0 0.0
    %424 = vmatprep.subr.mxu0 0.0
    %425 = vmatpush1.xpose.msra.mxu0 0.0
    %426 = vmatprep.subr.mxu0 0.0
    %427 = vmatpush1.xpose.msra.mxu0 0.0
    %428 = vmatprep.subr.mxu0 0.0
    %429 = vmatpush1.xpose.msra.mxu0 0.0
    %430 = vmatprep.subr.mxu0 0.0
    %431 = vmatpush1.xpose.msra.mxu0 0.0
    %432 = vmatprep.subr.mxu0 0.0
    %433 = vmatpush1.xpose.msra.mxu0 0.0
    %434 = vmatprep.subr.mxu0 0.0
    %435 = vmatpush1.xpose.msra.mxu0 0.0
    %436 = vmatprep.subr.mxu0 0.0
    %437 = vmatpush1.xpose.msra.mxu0 0.0
    %438 = vmatprep.subr.mxu0 0.0
    %439 = vmatpush1.xpose.msra.mxu0 0.0
    %440 = vmatprep.subr.mxu0 0.0
    %441 = vmatpush1.xpose.msra.mxu0 0.0
    %442 = vmatprep.subr.mxu0 0.0
    %443 = vmatpush1.xpose.msra.mxu0 0.0
    %444 = vmatprep.subr.mxu0 0.0
    %445 = vmatpush1.xpose.msra.mxu0 0.0
    %446 = vmatprep.subr.mxu0 0.0
    %447 = vmatpush1.xpose.msra.mxu0 0.0
    %448 = vmatprep.subr.mxu0 0.0
    %449 = vmatpush1.xpose.msra.mxu0 0.0
    %450 = vmatprep.subr.mxu0 0.0
    %451 = vmatpush1.xpose.msra.mxu0 0.0
    %452 = vmatprep.subr.mxu0 0.0
    %453 = vmatpush1.xpose.msra.mxu0 0.0
    %454 = vmatprep.subr.mxu0 0.0
    %455 = vmatpush1.xpose.msra.mxu0 0.0
    %456 = vmatprep.subr.mxu0 0.0
    %457 = vmatpush1.xpose.msra.mxu0 0.0
    %458 = vmatprep.subr.mxu0 0.0
    %459 = vmatpush1.xpose.msra.mxu0 0.0
    %460 = vmatprep.subr.mxu0 0.0
    %461 = vmatpush1.xpose.msra.mxu0 0.0
    %462 = vmatprep.subr.mxu0 0.0
    %463 = vmatpush1.xpose.msra.mxu0 0.0
    %464 = vmatprep.subr.mxu0 0.0
    %465 = vmatpush1.xpose.msra.mxu0 0.0
    %466 = vmatprep.subr.mxu0 0.0
    %467 = vmatpush1.xpose.msra.mxu0 0.0
    %468 = vmatprep.subr.mxu0 0.0
    %469 = vmatpush1.xpose.msra.mxu0 0.0
    %470 = vmatprep.mubr.f32.mxu0 0.0
    %471 = vmatmul.mubr.f32.gmra.mrb[0].mxu0 %v398
    %v472 = vpop.f32.mrb[0].mxu0
    %v473 = vadd.f32 0.0, %v472
    %v474 = vpop.f32.mrb[0].mxu0
    %475 = vdwg.mxu0
    %vm476 = vcmask 130048
    %v477 = vsel %vm476, %v394, -inf
    %478 = vmax.xlane.f32.xlu0 %v477
    %v479 = vpop.xlane.xlu0 %478
    %v480 = vsel %vm476, %v473, -inf
    %481 = vmax.xlane.f32.xlu0 %v480
    %v482 = vpop.xlane.xlu0 %481
    %v483 = vsub.f32 %v394, %v479
    %v484 = vsub.f32 %v473, %v482
    %v485 = vmul.f32 %v483, 1.442695
    %v486 = vpow.pop %v485
    %v487 = vmul.f32 %v484, 1.442695
    %v488 = vpow.pop %v487
    %v489 = vsel %vm476, %v486, 0.0
    %490 = vadd.xlane.f32.xlu0 %v489
    %v491 = vpop.xlane.xlu0 %490
    %v492 = vsel %vm476, %v488, 0.0
    %493 = vadd.xlane.f32.xlu0 %v492
    %v494 = vpop.xlane.xlu0 %493
    %v495 = vrcp.pop %v491
    %v496 = vmul.f32 %v486, %v495
    %v497 = vrcp.pop %v494
    %v498 = vmul.f32 %v488, %v497
    %499 = vrot.lane.b32.xlu0 %v213, 64
    %v500 = vpop.permute.xlu0 %499
    %501 = vrot.lane.b32.xlu0 %v218, 64
    %v502 = vpop.permute.xlu0 %501
    %v506 = vsel %vm476, %v496, 0
    %508 = vmatprep.subr.mxu0 0.0
    %509 = vmatpush1.msra.mxu0 %v500
    %510 = vmatprep.subr.mxu0 0.0
    %511 = vmatpush1.msra.mxu0 %v502
    %512 = vmatprep.subr.mxu0 0.0
    %513 = vmatpush1.msra.mxu0 0.0
    %514 = vmatprep.subr.mxu0 0.0
    %515 = vmatpush1.msra.mxu0 0.0
    %516 = vmatprep.subr.mxu0 0.0
    %517 = vmatpush1.msra.mxu0 0.0
    %518 = vmatprep.subr.mxu0 0.0
    %519 = vmatpush1.msra.mxu0 0.0
    %520 = vmatprep.subr.mxu0 0.0
    %521 = vmatpush1.msra.mxu0 0.0
    %522 = vmatprep.subr.mxu0 0.0
    %523 = vmatpush1.msra.mxu0 0.0
    %524 = vmatprep.subr.mxu0 0.0
    %525 = vmatpush1.msra.mxu0 0.0
    %526 = vmatprep.subr.mxu0 0.0
    %527 = vmatpush1.msra.mxu0 0.0
    %528 = vmatprep.subr.mxu0 0.0
    %529 = vmatpush1.msra.mxu0 0.0
    %530 = vmatprep.subr.mxu0 0.0
    %531 = vmatpush1.msra.mxu0 0.0
    %532 = vmatprep.subr.mxu0 0.0
    %533 = vmatpush1.msra.mxu0 0.0
    %534 = vmatprep.subr.mxu0 0.0
    %535 = vmatpush1.msra.mxu0 0.0
    %536 = vmatprep.subr.mxu0 0.0
    %537 = vmatpush1.msra.mxu0 0.0
    %538 = vmatprep.subr.mxu0 0.0
    %539 = vmatpush1.msra.mxu0 0.0
    %540 = vmatprep.subr.mxu0 0.0
    %541 = vmatpush1.msra.mxu0 0.0
    %542 = vmatprep.subr.mxu0 0.0
    %543 = vmatpush1.msra.mxu0 0.0
    %544 = vmatprep.subr.mxu0 0.0
    %545 = vmatpush1.msra.mxu0 0.0
    %546 = vmatprep.subr.mxu0 0.0
    %547 = vmatpush1.msra.mxu0 0.0
    %548 = vmatprep.subr.mxu0 0.0
    %549 = vmatpush1.msra.mxu0 0.0
    %550 = vmatprep.subr.mxu0 0.0
    %551 = vmatpush1.msra.mxu0 0.0
    %552 = vmatprep.subr.mxu0 0.0
    %553 = vmatpush1.msra.mxu0 0.0
    %554 = vmatprep.subr.mxu0 0.0
    %555 = vmatpush1.msra.mxu0 0.0
    %556 = vmatprep.subr.mxu0 0.0
    %557 = vmatpush1.msra.mxu0 0.0
    %558 = vmatprep.subr.mxu0 0.0
    %559 = vmatpush1.msra.mxu0 0.0
    %560 = vmatprep.subr.mxu0 0.0
    %561 = vmatpush1.msra.mxu0 0.0
    %562 = vmatprep.subr.mxu0 0.0
    %563 = vmatpush1.msra.mxu0 0.0
    %564 = vmatprep.subr.mxu0 0.0
    %565 = vmatpush1.msra.mxu0 0.0
    %566 = vmatprep.subr.mxu0 0.0
    %567 = vmatpush1.msra.mxu0 0.0
    %568 = vmatprep.subr.mxu0 0.0
    %569 = vmatpush1.msra.mxu0 0.0
    %570 = vmatprep.subr.mxu0 0.0
    %571 = vmatpush1.msra.mxu0 0.0
    %572 = vmatprep.mubr.f32.mxu0 0.0
    %573 = vmatmul.mubr.f32.gmra.mrb[0].mxu0 %v506
    %v574 = vpop.f32.mrb[0].mxu0
    %v575 = vadd.f32 0.0, %v574
    %v576 = vpop.f32.mrb[0].mxu0
    %577 = vdwg.mxu0
    %578 = vrot.lane.b32.xlu0 %v223, 64
    %v579 = vpop.permute.xlu0 %578
    %580 = vrot.lane.b32.xlu0 %v228, 64
    %v581 = vpop.permute.xlu0 %580
    %v585 = vsel %vm476, %v498, 0
    %587 = vmatprep.subr.mxu0 0.0
    %588 = vmatpush1.msra.mxu0 %v579
    %589 = vmatprep.subr.mxu0 0.0
    %590 = vmatpush1.msra.mxu0 %v581
    %591 = vmatprep.subr.mxu0 0.0
    %592 = vmatpush1.msra.mxu0 0.0
    %593 = vmatprep.subr.mxu0 0.0
    %594 = vmatpush1.msra.mxu0 0.0
    %595 = vmatprep.subr.mxu0 0.0
    %596 = vmatpush1.msra.mxu0 0.0
    %597 = vmatprep.subr.mxu0 0.0
    %598 = vmatpush1.msra.mxu0 0.0
    %599 = vmatprep.subr.mxu0 0.0
    %600 = vmatpush1.msra.mxu0 0.0
    %601 = vmatprep.subr.mxu0 0.0
    %602 = vmatpush1.msra.mxu0 0.0
    %603 = vmatprep.subr.mxu0 0.0
    %604 = vmatpush1.msra.mxu0 0.0
    %605 = vmatprep.subr.mxu0 0.0
    %606 = vmatpush1.msra.mxu0 0.0
    %607 = vmatprep.subr.mxu0 0.0
    %608 = vmatpush1.msra.mxu0 0.0
    %609 = vmatprep.subr.mxu0 0.0
    %610 = vmatpush1.msra.mxu0 0.0
    %611 = vmatprep.subr.mxu0 0.0
    %612 = vmatpush1.msra.mxu0 0.0
    %613 = vmatprep.subr.mxu0 0.0
    %614 = vmatpush1.msra.mxu0 0.0
    %615 = vmatprep.subr.mxu0 0.0
    %616 = vmatpush1.msra.mxu0 0.0
    %617 = vmatprep.subr.mxu0 0.0
    %618 = vmatpush1.msra.mxu0 0.0
    %619 = vmatprep.subr.mxu0 0.0
    %620 = vmatpush1.msra.mxu0 0.0
    %621 = vmatprep.subr.mxu0 0.0
    %622 = vmatpush1.msra.mxu0 0.0
    %623 = vmatprep.subr.mxu0 0.0
    %624 = vmatpush1.msra.mxu0 0.0
    %625 = vmatprep.subr.mxu0 0.0
    %626 = vmatpush1.msra.mxu0 0.0
    %627 = vmatprep.subr.mxu0 0.0
    %628 = vmatpush1.msra.mxu0 0.0
    %629 = vmatprep.subr.mxu0 0.0
    %630 = vmatpush1.msra.mxu0 0.0
    %631 = vmatprep.subr.mxu0 0.0
    %632 = vmatpush1.msra.mxu0 0.0
    %633 = vmatprep.subr.mxu0 0.0
    %634 = vmatpush1.msra.mxu0 0.0
    %635 = vmatprep.subr.mxu0 0.0
    %636 = vmatpush1.msra.mxu0 0.0
    %637 = vmatprep.subr.mxu0 0.0
    %638 = vmatpush1.msra.mxu0 0.0
    %639 = vmatprep.subr.mxu0 0.0
    %640 = vmatpush1.msra.mxu0 0.0
    %641 = vmatprep.subr.mxu0 0.0
    %642 = vmatpush1.msra.mxu0 0.0
    %643 = vmatprep.subr.mxu0 0.0
    %644 = vmatpush1.msra.mxu0 0.0
    %645 = vmatprep.subr.mxu0 0.0
    %646 = vmatpush1.msra.mxu0 0.0
    %647 = vmatprep.subr.mxu0 0.0
    %648 = vmatpush1.msra.mxu0 0.0
    %649 = vmatprep.subr.mxu0 0.0
    %650 = vmatpush1.msra.mxu0 0.0
    %651 = vmatprep.mubr.f32.mxu0 0.0
    %652 = vmatmul.mubr.f32.gmra.mrb[0].mxu0 %v585
    %v653 = vpop.f32.mrb[0].mxu0
    %v654 = vadd.f32 0.0, %v653
    %v655 = vpop.f32.mrb[0].mxu0
    %656 = vdwg.mxu0
    %v657 = vld [vmem:[#allocation8] sm:$0xff]
    %v658 = vld [vmem:[#allocation8 + $0x8] sm:$0xff]
    %v659 = vld [vmem:[#allocation8 + $0x10] sm:$0xff]
    %v660 = vld [vmem:[#allocation8 + $0x18] sm:$0xff]
    %v662 = vsel %vm133, %v575, 0
    %v665 = vsel %vm133, %v654, 0
    %667 = vmatprep.subr.mxu0 0.0
    %668 = vmatpush1.msra.mxu0 %v657
    %669 = vmatprep.subr.mxu0 0.0
    %670 = vmatpush1.msra.mxu0 %v658
    %671 = vmatprep.subr.mxu0 0.0
    %672 = vmatpush1.msra.mxu0 %v659
    %673 = vmatprep.subr.mxu0 0.0
    %674 = vmatpush1.msra.mxu0 %v660
    %675 = vmatprep.subr.mxu0 0.0
    %676 = vmatpush1.msra.mxu0 0.0
    %677 = vmatprep.subr.mxu0 0.0
    %678 = vmatpush1.msra.mxu0 0.0
    %679 = vmatprep.subr.mxu0 0.0
    %680 = vmatpush1.msra.mxu0 0.0
    %681 = vmatprep.subr.mxu0 0.0
    %682 = vmatpush1.msra.mxu0 0.0
    %683 = vmatprep.subr.mxu0 0.0
    %684 = vmatpush1.msra.mxu0 0.0
    %685 = vmatprep.subr.mxu0 0.0
    %686 = vmatpush1.msra.mxu0 0.0
    %687 = vmatprep.subr.mxu0 0.0
    %688 = vmatpush1.msra.mxu0 0.0
    %689 = vmatprep.subr.mxu0 0.0
    %690 = vmatpush1.msra.mxu0 0.0
    %691 = vmatprep.subr.mxu0 0.0
    %692 = vmatpush1.msra.mxu0 0.0
    %693 = vmatprep.subr.mxu0 0.0
    %694 = vmatpush1.msra.mxu0 0.0
    %695 = vmatprep.subr.mxu0 0.0
    %696 = vmatpush1.msra.mxu0 0.0
    %697 = vmatprep.subr.mxu0 0.0
    %698 = vmatpush1.msra.mxu0 0.0
    %699 = vmatprep.subr.mxu0 0.0
    %700 = vmatpush1.msra.mxu0 0.0
    %701 = vmatprep.subr.mxu0 0.0
    %702 = vmatpush1.msra.mxu0 0.0
    %703 = vmatprep.subr.mxu0 0.0
    %704 = vmatpush1.msra.mxu0 0.0
    %705 = vmatprep.subr.mxu0 0.0
    %706 = vmatpush1.msra.mxu0 0.0
    %707 = vmatprep.subr.mxu0 0.0
    %708 = vmatpush1.msra.mxu0 0.0
    %709 = vmatprep.subr.mxu0 0.0
    %710 = vmatpush1.msra.mxu0 0.0
    %711 = vmatprep.subr.mxu0 0.0
    %712 = vmatpush1.msra.mxu0 0.0
    %713 = vmatprep.subr.mxu0 0.0
    %714 = vmatpush1.msra.mxu0 0.0
    %715 = vmatprep.subr.mxu0 0.0
    %716 = vmatpush1.msra.mxu0 0.0
    %717 = vmatprep.subr.mxu0 0.0
    %718 = vmatpush1.msra.mxu0 0.0
    %719 = vmatprep.subr.mxu0 0.0
    %720 = vmatpush1.msra.mxu0 0.0
    %721 = vmatprep.subr.mxu0 0.0
    %722 = vmatpush1.msra.mxu0 0.0
    %723 = vmatprep.subr.mxu0 0.0
    %724 = vmatpush1.msra.mxu0 0.0
    %725 = vmatprep.subr.mxu0 0.0
    %726 = vmatpush1.msra.mxu0 0.0
    %727 = vmatprep.subr.mxu0 0.0
    %728 = vmatpush1.msra.mxu0 0.0
    %729 = vmatprep.subr.mxu0 0.0
    %730 = vmatpush1.msra.mxu0 0.0
    %731 = vmatprep.mubr.f32.mxu0 0.0
    %732 = vmatmul.mubr.f32.gmra.mrb[0].mxu0 %v662
    %v733 = vpop.f32.mrb[0].mxu0
    %v734 = vadd.f32 0.0, %v733
    %v735 = vpop.f32.mrb[0].mxu0
    %736 = vmatprep.mubr.f32.mxu0 0.0
    %737 = vmatmul.mubr.f32.gmra.mrb[0].mxu0 %v665
    %v738 = vpop.f32.mrb[0].mxu0
    %v739 = vadd.f32 0.0, %v738
    %v740 = vpop.f32.mrb[0].mxu0
    %741 = vdwg.mxu0
    %v742 = vadd.f32 %v121, %v734
    %v743 = vadd.f32 %v122, %v739
    %v744 = vld [vmem:[#allocation10] sm:$0xff]
    %v745 = vld [vmem:[#allocation10 + $0x8] sm:$0xff]
    %v746 = vld [vmem:[#allocation10 + $0x10] sm:$0xff]
    %v747 = vld [vmem:[#allocation10 + $0x18] sm:$0xff]
    %v749 = vsel %vm133, %v742, 0
    %v752 = vsel %vm133, %v743, 0
    %754 = vmatprep.subr.mxu0 0.0
    %755 = vmatpush1.msra.mxu0 %v744
    %756 = vmatprep.subr.mxu0 0.0
    %757 = vmatpush1.msra.mxu0 %v745
    %758 = vmatprep.subr.mxu0 0.0
    %759 = vmatpush1.msra.mxu0 %v746
    %760 = vmatprep.subr.mxu0 0.0
    %761 = vmatpush1.msra.mxu0 %v747
    %762 = vmatprep.subr.mxu0 0.0
    %763 = vmatpush1.msra.mxu0 0.0
    %764 = vmatprep.subr.mxu0 0.0
    %765 = vmatpush1.msra.mxu0 0.0
    %766 = vmatprep.subr.mxu0 0.0
    %767 = vmatpush1.msra.mxu0 0.0
    %768 = vmatprep.subr.mxu0 0.0
    %769 = vmatpush1.msra.mxu0 0.0
    %770 = vmatprep.subr.mxu0 0.0
    %771 = vmatpush1.msra.mxu0 0.0
    %772 = vmatprep.subr.mxu0 0.0
    %773 = vmatpush1.msra.mxu0 0.0
    %774 = vmatprep.subr.mxu0 0.0
    %775 = vmatpush1.msra.mxu0 0.0
    %776 = vmatprep.subr.mxu0 0.0
    %777 = vmatpush1.msra.mxu0 0.0
    %778 = vmatprep.subr.mxu0 0.0
    %779 = vmatpush1.msra.mxu0 0.0
    %780 = vmatprep.subr.mxu0 0.0
    %781 = vmatpush1.msra.mxu0 0.0
    %782 = vmatprep.subr.mxu0 0.0
    %783 = vmatpush1.msra.mxu0 0.0
    %784 = vmatprep.subr.mxu0 0.0
    %785 = vmatpush1.msra.mxu0 0.0
    %786 = vmatprep.subr.mxu0 0.0
    %787 = vmatpush1.msra.mxu0 0.0
    %788 = vmatprep.subr.mxu0 0.0
    %789 = vmatpush1.msra.mxu0 0.0
    %790 = vmatprep.subr.mxu0 0.0
    %791 = vmatpush1.msra.mxu0 0.0
    %792 = vmatprep.subr.mxu0 0.0
    %793 = vmatpush1.msra.mxu0 0.0
    %794 = vmatprep.subr.mxu0 0.0
    %795 = vmatpush1.msra.mxu0 0.0
    %796 = vmatprep.subr.mxu0 0.0
    %797 = vmatpush1.msra.mxu0 0.0
    %798 = vmatprep.subr.mxu0 0.0
    %799 = vmatpush1.msra.mxu0 0.0
    %800 = vmatprep.subr.mxu0 0.0
    %801 = vmatpush1.msra.mxu0 0.0
    %802 = vmatprep.subr.mxu0 0.0
    %803 = vmatpush1.msra.mxu0 0.0
    %804 = vmatprep.subr.mxu0 0.0
    %805 = vmatpush1.msra.mxu0 0.0
    %806 = vmatprep.subr.mxu0 0.0
    %807 = vmatpush1.msra.mxu0 0.0
    %808 = vmatprep.subr.mxu0 0.0
    %809 = vmatpush1.msra.mxu0 0.0
    %810 = vmatprep.subr.mxu0 0.0
    %811 = vmatpush1.msra.mxu0 0.0
    %812 = vmatprep.subr.mxu0 0.0
    %813 = vmatpush1.msra.mxu0 0.0
    %814 = vmatprep.subr.mxu0 0.0
    %815 = vmatpush1.msra.mxu0 0.0
    %816 = vmatprep.subr.mxu0 0.0
    %817 = vmatpush1.msra.mxu0 0.0
    %818 = vmatprep.mubr.f32.mxu0 0.0
    %819 = vmatmul.mubr.f32.gmra.mrb[0].mxu0 %v749
    %v820 = vpop.f32.mrb[0].mxu0
    %v821 = vadd.f32 0.0, %v820
    %v822 = vpop.f32.mrb[0].mxu0
    %823 = vmatprep.mubr.f32.mxu0 0.0
    %824 = vmatmul.mubr.f32.gmra.mrb[0].mxu0 %v752
    %v825 = vpop.f32.mrb[0].mxu0
    %v826 = vadd.f32 0.0, %v825
    %v827 = vpop.f32.mrb[0].mxu0
    %828 = vdwg.mxu0
    %v829 = vadd.f32 %v127, %v821
    %v830 = vadd.f32 %v128, %v826
    %s831 = scalar_lea.vmem [#allocation5], 32
    %v832 = vld [vmem:[%s831] sm:$0xff]
    %v833 = vld [vmem:[%s831 + $0x8] sm:$0xff]
    %v834 = vld [vmem:[%s831 + $0x10] sm:$0xff]
    %v835 = vld [vmem:[%s831 + $0x18] sm:$0xff]
    %836 = vmatprep.subr.mxu0 0.0
    %837 = vmatpush1.msra.mxu0 %v832
    %838 = vmatprep.subr.mxu0 0.0
    %839 = vmatpush1.msra.mxu0 %v833
    %840 = vmatprep.subr.mxu0 0.0
    %841 = vmatpush1.msra.mxu0 %v834
    %842 = vmatprep.subr.mxu0 0.0
    %843 = vmatpush1.msra.mxu0 %v835
    %844 = vmatprep.subr.mxu0 0.0
    %845 = vmatpush1.msra.mxu0 0.0
    %846 = vmatprep.subr.mxu0 0.0
    %847 = vmatpush1.msra.mxu0 0.0
    %848 = vmatprep.subr.mxu0 0.0
    %849 = vmatpush1.msra.mxu0 0.0
    %850 = vmatprep.subr.mxu0 0.0
    %851 = vmatpush1.msra.mxu0 0.0
    %852 = vmatprep.subr.mxu0 0.0
    %853 = vmatpush1.msra.mxu0 0.0
    %854 = vmatprep.subr.mxu0 0.0
    %855 = vmatpush1.msra.mxu0 0.0
    %856 = vmatprep.subr.mxu0 0.0
    %857 = vmatpush1.msra.mxu0 0.0
    %858 = vmatprep.subr.mxu0 0.0
    %859 = vmatpush1.msra.mxu0 0.0
    %860 = vmatprep.subr.mxu0 0.0
    %861 = vmatpush1.msra.mxu0 0.0
    %862 = vmatprep.subr.mxu0 0.0
    %863 = vmatpush1.msra.mxu0 0.0
    %864 = vmatprep.subr.mxu0 0.0
    %865 = vmatpush1.msra.mxu0 0.0
    %866 = vmatprep.subr.mxu0 0.0
    %867 = vmatpush1.msra.mxu0 0.0
    %868 = vmatprep.subr.mxu0 0.0
    %869 = vmatpush1.msra.mxu0 0.0
    %870 = vmatprep.subr.mxu0 0.0
    %871 = vmatpush1.msra.mxu0 0.0
    %872 = vmatprep.subr.mxu0 0.0
    %873 = vmatpush1.msra.mxu0 0.0
    %874 = vmatprep.subr.mxu0 0.0
    %875 = vmatpush1.msra.mxu0 0.0
    %876 = vmatprep.subr.mxu0 0.0
    %877 = vmatpush1.msra.mxu0 0.0
    %878 = vmatprep.subr.mxu0 0.0
    %879 = vmatpush1.msra.mxu0 0.0
    %880 = vmatprep.subr.mxu0 0.0
    %881 = vmatpush1.msra.mxu0 0.0
    %882 = vmatprep.subr.mxu0 0.0
    %883 = vmatpush1.msra.mxu0 0.0
    %884 = vmatprep.subr.mxu0 0.0
    %885 = vmatpush1.msra.mxu0 0.0
    %886 = vmatprep.subr.mxu0 0.0
    %887 = vmatpush1.msra.mxu0 0.0
    %888 = vmatprep.subr.mxu0 0.0
    %889 = vmatpush1.msra.mxu0 0.0
    %890 = vmatprep.subr.mxu0 0.0
    %891 = vmatpush1.msra.mxu0 0.0
    %892 = vmatprep.subr.mxu0 0.0
    %893 = vmatpush1.msra.mxu0 0.0
    %894 = vmatprep.subr.mxu0 0.0
    %895 = vmatpush1.msra.mxu0 0.0
    %896 = vmatprep.subr.mxu0 0.0
    %897 = vmatpush1.msra.mxu0 0.0
    %898 = vmatprep.subr.mxu0 0.0
    %899 = vmatpush1.msra.mxu0 0.0
    %900 = vmatprep.mubr.f32.mxu0 0.0
    %901 = vmatmul.mubr.f32.gmra.mrb[0].mxu0 %v749
    %v902 = vpop.f32.mrb[0].mxu0
    %v903 = vadd.f32 0.0, %v902
    %v904 = vpop.f32.mrb[0].mxu0
    %905 = vmatprep.mubr.f32.mxu0 0.0
    %906 = vmatmul.mubr.f32.gmra.mrb[0].mxu0 %v752
    %v907 = vpop.f32.mrb[0].mxu0
    %v908 = vadd.f32 0.0, %v907
    %v909 = vpop.f32.mrb[0].mxu0
    %910 = vdwg.mxu0
    %v911 = vmul.f32 %v903, 0.17677669
    %v912 = vmul.f32 %v908, 0.17677669
    %913 = vrot.lane.b32.xlu0 %v213, 96
    %v914 = vpop.permute.xlu0 %913
    %915 = vrot.lane.b32.xlu0 %v218, 96
    %v916 = vpop.permute.xlu0 %915
    %v918 = vsel %vm133, %v911, 0
    %v920 = vsel %vm133, %v914, 0
    %v922 = vsel %vm133, %v916, 0
    %924 = vmatprep.subr.mxu0 0.0
    %925 = vmatpush1.xpose.msra.mxu0 %v920
    %926 = vmatprep.subr.mxu0 0.0
    %927 = vmatpush1.xpose.msra.mxu0 %v922
    %928 = vmatprep.subr.mxu0 0.0
    %929 = vmatpush1.xpose.msra.mxu0 0.0
    %930 = vmatprep.subr.mxu0 0.0
    %931 = vmatpush1.xpose.msra.mxu0 0.0
    %932 = vmatprep.subr.mxu0 0.0
    %933 = vmatpush1.xpose.msra.mxu0 0.0
    %934 = vmatprep.subr.mxu0 0.0
    %935 = vmatpush1.xpose.msra.mxu0 0.0
    %936 = vmatprep.subr.mxu0 0.0
    %937 = vmatpush1.xpose.msra.mxu0 0.0
    %938 = vmatprep.subr.mxu0 0.0
    %939 = vmatpush1.xpose.msra.mxu0 0.0
    %940 = vmatprep.subr.mxu0 0.0
    %941 = vmatpush1.xpose.msra.mxu0 0.0
    %942 = vmatprep.subr.mxu0 0.0
    %943 = vmatpush1.xpose.msra.mxu0 0.0
    %944 = vmatprep.subr.mxu0 0.0
    %945 = vmatpush1.xpose.msra.mxu0 0.0
    %946 = vmatprep.subr.mxu0 0.0
    %947 = vmatpush1.xpose.msra.mxu0 0.0
    %948 = vmatprep.subr.mxu0 0.0
    %949 = vmatpush1.xpose.msra.mxu0 0.0
    %950 = vmatprep.subr.mxu0 0.0
    %951 = vmatpush1.xpose.msra.mxu0 0.0
    %952 = vmatprep.subr.mxu0 0.0
    %953 = vmatpush1.xpose.msra.mxu0 0.0
    %954 = vmatprep.subr.mxu0 0.0
    %955 = vmatpush1.xpose.msra.mxu0 0.0
    %956 = vmatprep.subr.mxu0 0.0
    %957 = vmatpush1.xpose.msra.mxu0 0.0
    %958 = vmatprep.subr.mxu0 0.0
    %959 = vmatpush1.xpose.msra.mxu0 0.0
    %960 = vmatprep.subr.mxu0 0.0
    %961 = vmatpush1.xpose.msra.mxu0 0.0
    %962 = vmatprep.subr.mxu0 0.0
    %963 = vmatpush1.xpose.msra.mxu0 0.0
    %964 = vmatprep.subr.mxu0 0.0
    %965 = vmatpush1.xpose.msra.mxu0 0.0
    %966 = vmatprep.subr.mxu0 0.0
    %967 = vmatpush1.xpose.msra.mxu0 0.0
    %968 = vmatprep.subr.mxu0 0.0
    %969 = vmatpush1.xpose.msra.mxu0 0.0
    %970 = vmatprep.subr.mxu0 0.0
    %971 = vmatpush1.xpose.msra.mxu0 0.0
    %972 = vmatprep.subr.mxu0 0.0
    %973 = vmatpush1.xpose.msra.mxu0 0.0
    %974 = vmatprep.subr.mxu0 0.0
    %975 = vmatpush1.xpose.msra.mxu0 0.0
    %976 = vmatprep.subr.mxu0 0.0
    %977 = vmatpush1.xpose.msra.mxu0 0.0
    %978 = vmatprep.subr.mxu0 0.0
    %979 = vmatpush1.xpose.msra.mxu0 0.0
    %980 = vmatprep.subr.mxu0 0.0
    %981 = vmatpush1.xpose.msra.mxu0 0.0
    %982 = vmatprep.subr.mxu0 0.0
    %983 = vmatpush1.xpose.msra.mxu0 0.0
    %984 = vmatprep.subr.mxu0 0.0
    %985 = vmatpush1.xpose.msra.mxu0 0.0
    %986 = vmatprep.subr.mxu0 0.0
    %987 = vmatpush1.xpose.msra.mxu0 0.0
    %988 = vmatprep.mubr.f32.mxu0 0.0
    %989 = vmatmul.mubr.f32.gmra.mrb[0].mxu0 %v918
    %v990 = vpop.f32.mrb[0].mxu0
    %v991 = vadd.f32 0.0, %v990
    %v992 = vpop.f32.mrb[0].mxu0
    %993 = vdwg.mxu0
    %994 = vrot.lane.b32.xlu0 %v223, 96
    %v995 = vpop.permute.xlu0 %994
    %996 = vrot.lane.b32.xlu0 %v228, 96
    %v997 = vpop.permute.xlu0 %996
    %v999 = vsel %vm133, %v912, 0
    %v1001 = vsel %vm133, %v995, 0
    %v1003 = vsel %vm133, %v997, 0
    %1005 = vmatprep.subr.mxu0 0.0
    %1006 = vmatpush1.xpose.msra.mxu0 %v1001
    %1007 = vmatprep.subr.mxu0 0.0
    %1008 = vmatpush1.xpose.msra.mxu0 %v1003
    %1009 = vmatprep.subr.mxu0 0.0
    %1010 = vmatpush1.xpose.msra.mxu0 0.0
    %1011 = vmatprep.subr.mxu0 0.0
    %1012 = vmatpush1.xpose.msra.mxu0 0.0
    %1013 = vmatprep.subr.mxu0 0.0
    %1014 = vmatpush1.xpose.msra.mxu0 0.0
    %1015 = vmatprep.subr.mxu0 0.0
    %1016 = vmatpush1.xpose.msra.mxu0 0.0
    %1017 = vmatprep.subr.mxu0 0.0
    %1018 = vmatpush1.xpose.msra.mxu0 0.0
    %1019 = vmatprep.subr.mxu0 0.0
    %1020 = vmatpush1.xpose.msra.mxu0 0.0
    %1021 = vmatprep.subr.mxu0 0.0
    %1022 = vmatpush1.xpose.msra.mxu0 0.0
    %1023 = vmatprep.subr.mxu0 0.0
    %1024 = vmatpush1.xpose.msra.mxu0 0.0
    %1025 = vmatprep.subr.mxu0 0.0
    %1026 = vmatpush1.xpose.msra.mxu0 0.0
    %1027 = vmatprep.subr.mxu0 0.0
    %1028 = vmatpush1.xpose.msra.mxu0 0.0
    %1029 = vmatprep.subr.mxu0 0.0
    %1030 = vmatpush1.xpose.msra.mxu0 0.0
    %1031 = vmatprep.subr.mxu0 0.0
    %1032 = vmatpush1.xpose.msra.mxu0 0.0
    %1033 = vmatprep.subr.mxu0 0.0
    %1034 = vmatpush1.xpose.msra.mxu0 0.0
    %1035 = vmatprep.subr.mxu0 0.0
    %1036 = vmatpush1.xpose.msra.mxu0 0.0
    %1037 = vmatprep.subr.mxu0 0.0
    %1038 = vmatpush1.xpose.msra.mxu0 0.0
    %1039 = vmatprep.subr.mxu0 0.0
    %1040 = vmatpush1.xpose.msra.mxu0 0.0
    %1041 = vmatprep.subr.mxu0 0.0
    %1042 = vmatpush1.xpose.msra.mxu0 0.0
    %1043 = vmatprep.subr.mxu0 0.0
    %1044 = vmatpush1.xpose.msra.mxu0 0.0
    %1045 = vmatprep.subr.mxu0 0.0
    %1046 = vmatpush1.xpose.msra.mxu0 0.0
    %1047 = vmatprep.subr.mxu0 0.0
    %1048 = vmatpush1.xpose.msra.mxu0 0.0
    %1049 = vmatprep.subr.mxu0 0.0
    %1050 = vmatpush1.xpose.msra.mxu0 0.0
    %1051 = vmatprep.subr.mxu0 0.0
    %1052 = vmatpush1.xpose.msra.mxu0 0.0
    %1053 = vmatprep.subr.mxu0 0.0
    %1054 = vmatpush1.xpose.msra.mxu0 0.0
    %1055 = vmatprep.subr.mxu0 0.0
    %1056 = vmatpush1.xpose.msra.mxu0 0.0
    %1057 = vmatprep.subr.mxu0 0.0
    %1058 = vmatpush1.xpose.msra.mxu0 0.0
    %1059 = vmatprep.subr.mxu0 0.0
    %1060 = vmatpush1.xpose.msra.mxu0 0.0
    %1061 = vmatprep.subr.mxu0 0.0
    %1062 = vmatpush1.xpose.msra.mxu0 0.0
    %1063 = vmatprep.subr.mxu0 0.0
    %1064 = vmatpush1.xpose.msra.mxu0 0.0
    %1065 = vmatprep.subr.mxu0 0.0
    %1066 = vmatpush1.xpose.msra.mxu0 0.0
    %1067 = vmatprep.subr.mxu0 0.0
    %1068 = vmatpush1.xpose.msra.mxu0 0.0
    %1069 = vmatprep.mubr.f32.mxu0 0.0
    %1070 = vmatmul.mubr.f32.gmra.mrb[0].mxu0 %v999
    %v1071 = vpop.f32.mrb[0].mxu0
    %v1072 = vadd.f32 0.0, %v1071
    %v1073 = vpop.f32.mrb[0].mxu0
    %1074 = vdwg.mxu0
    %v1075 = vsel %vm476, %v991, -inf
    %1076 = vmax.xlane.f32.xlu0 %v1075
    %v1077 = vpop.xlane.xlu0 %1076
    %v1078 = vsel %vm476, %v1072, -inf
    %1079 = vmax.xlane.f32.xlu0 %v1078
    %v1080 = vpop.xlane.xlu0 %1079
    %v1081 = vsub.f32 %v991, %v1077
    %v1082 = vsub.f32 %v1072, %v1080
    %v1083 = vmul.f32 %v1081, 1.442695
    %v1084 = vpow.pop %v1083
    %v1085 = vmul.f32 %v1082, 1.442695
    %v1086 = vpow.pop %v1085
    %v1087 = vsel %vm476, %v1084, 0.0
    %1088 = vadd.xlane.f32.xlu0 %v1087
    %v1089 = vpop.xlane.xlu0 %1088
    %v1090 = vsel %vm476, %v1086, 0.0
    %1091 = vadd.xlane.f32.xlu0 %v1090
    %v1092 = vpop.xlane.xlu0 %1091
    %v1093 = vrcp.pop %v1089
    %v1094 = vmul.f32 %v1084, %v1093
    %v1095 = vrcp.pop %v1092
    %v1096 = vmul.f32 %v1086, %v1095
    %1097 = vrot.lane.b32.xlu0 %v213, 32
    %v1098 = vpop.permute.xlu0 %1097
    %1099 = vrot.lane.b32.xlu0 %v218, 32
    %v1100 = vpop.permute.xlu0 %1099
    %v1104 = vsel %vm476, %v1094, 0
    %1106 = vmatprep.subr.mxu0 0.0
    %1107 = vmatpush1.msra.mxu0 %v1098
    %1108 = vmatprep.subr.mxu0 0.0
    %1109 = vmatpush1.msra.mxu0 %v1100
    %1110 = vmatprep.subr.mxu0 0.0
    %1111 = vmatpush1.msra.mxu0 0.0
    %1112 = vmatprep.subr.mxu0 0.0
    %1113 = vmatpush1.msra.mxu0 0.0
    %1114 = vmatprep.subr.mxu0 0.0
    %1115 = vmatpush1.msra.mxu0 0.0
    %1116 = vmatprep.subr.mxu0 0.0
    %1117 = vmatpush1.msra.mxu0 0.0
    %1118 = vmatprep.subr.mxu0 0.0
    %1119 = vmatpush1.msra.mxu0 0.0
    %1120 = vmatprep.subr.mxu0 0.0
    %1121 = vmatpush1.msra.mxu0 0.0
    %1122 = vmatprep.subr.mxu0 0.0
    %1123 = vmatpush1.msra.mxu0 0.0
    %1124 = vmatprep.subr.mxu0 0.0
    %1125 = vmatpush1.msra.mxu0 0.0
    %1126 = vmatprep.subr.mxu0 0.0
    %1127 = vmatpush1.msra.mxu0 0.0
    %1128 = vmatprep.subr.mxu0 0.0
    %1129 = vmatpush1.msra.mxu0 0.0
    %1130 = vmatprep.subr.mxu0 0.0
    %1131 = vmatpush1.msra.mxu0 0.0
    %1132 = vmatprep.subr.mxu0 0.0
    %1133 = vmatpush1.msra.mxu0 0.0
    %1134 = vmatprep.subr.mxu0 0.0
    %1135 = vmatpush1.msra.mxu0 0.0
    %1136 = vmatprep.subr.mxu0 0.0
    %1137 = vmatpush1.msra.mxu0 0.0
    %1138 = vmatprep.subr.mxu0 0.0
    %1139 = vmatpush1.msra.mxu0 0.0
    %1140 = vmatprep.subr.mxu0 0.0
    %1141 = vmatpush1.msra.mxu0 0.0
    %1142 = vmatprep.subr.mxu0 0.0
    %1143 = vmatpush1.msra.mxu0 0.0
    %1144 = vmatprep.subr.mxu0 0.0
    %1145 = vmatpush1.msra.mxu0 0.0
    %1146 = vmatprep.subr.mxu0 0.0
    %1147 = vmatpush1.msra.mxu0 0.0
    %1148 = vmatprep.subr.mxu0 0.0
    %1149 = vmatpush1.msra.mxu0 0.0
    %1150 = vmatprep.subr.mxu0 0.0
    %1151 = vmatpush1.msra.mxu0 0.0
    %1152 = vmatprep.subr.mxu0 0.0
    %1153 = vmatpush1.msra.mxu0 0.0
    %1154 = vmatprep.subr.mxu0 0.0
    %1155 = vmatpush1.msra.mxu0 0.0
    %1156 = vmatprep.subr.mxu0 0.0
    %1157 = vmatpush1.msra.mxu0 0.0
    %1158 = vmatprep.subr.mxu0 0.0
    %1159 = vmatpush1.msra.mxu0 0.0
    %1160 = vmatprep.subr.mxu0 0.0
    %1161 = vmatpush1.msra.mxu0 0.0
    %1162 = vmatprep.subr.mxu0 0.0
    %1163 = vmatpush1.msra.mxu0 0.0
    %1164 = vmatprep.subr.mxu0 0.0
    %1165 = vmatpush1.msra.mxu0 0.0
    %1166 = vmatprep.subr.mxu0 0.0
    %1167 = vmatpush1.msra.mxu0 0.0
    %1168 = vmatprep.subr.mxu0 0.0
    %1169 = vmatpush1.msra.mxu0 0.0
    %1170 = vmatprep.mubr.f32.mxu0 0.0
    %1171 = vmatmul.mubr.f32.gmra.mrb[0].mxu0 %v1104
    %v1172 = vpop.f32.mrb[0].mxu0
    %v1173 = vadd.f32 0.0, %v1172
    %v1174 = vpop.f32.mrb[0].mxu0
    %1175 = vdwg.mxu0
    %1176 = vrot.lane.b32.xlu0 %v223, 32
    %v1177 = vpop.permute.xlu0 %1176
    %1178 = vrot.lane.b32.xlu0 %v228, 32
    %v1179 = vpop.permute.xlu0 %1178
    %v1183 = vsel %vm476, %v1096, 0
    %1185 = vmatprep.subr.mxu0 0.0
    %1186 = vmatpush1.msra.mxu0 %v1177
    %1187 = vmatprep.subr.mxu0 0.0
    %1188 = vmatpush1.msra.mxu0 %v1179
    %1189 = vmatprep.subr.mxu0 0.0
    %1190 = vmatpush1.msra.mxu0 0.0
    %1191 = vmatprep.subr.mxu0 0.0
    %1192 = vmatpush1.msra.mxu0 0.0
    %1193 = vmatprep.subr.mxu0 0.0
    %1194 = vmatpush1.msra.mxu0 0.0
    %1195 = vmatprep.subr.mxu0 0.0
    %1196 = vmatpush1.msra.mxu0 0.0
    %1197 = vmatprep.subr.mxu0 0.0
    %1198 = vmatpush1.msra.mxu0 0.0
    %1199 = vmatprep.subr.mxu0 0.0
    %1200 = vmatpush1.msra.mxu0 0.0
    %1201 = vmatprep.subr.mxu0 0.0
    %1202 = vmatpush1.msra.mxu0 0.0
    %1203 = vmatprep.subr.mxu0 0.0
    %1204 = vmatpush1.msra.mxu0 0.0
    %1205 = vmatprep.subr.mxu0 0.0
    %1206 = vmatpush1.msra.mxu0 0.0
    %1207 = vmatprep.subr.mxu0 0.0
    %1208 = vmatpush1.msra.mxu0 0.0
    %1209 = vmatprep.subr.mxu0 0.0
    %1210 = vmatpush1.msra.mxu0 0.0
    %1211 = vmatprep.subr.mxu0 0.0
    %1212 = vmatpush1.msra.mxu0 0.0
    %1213 = vmatprep.subr.mxu0 0.0
    %1214 = vmatpush1.msra.mxu0 0.0
    %1215 = vmatprep.subr.mxu0 0.0
    %1216 = vmatpush1.msra.mxu0 0.0
    %1217 = vmatprep.subr.mxu0 0.0
    %1218 = vmatpush1.msra.mxu0 0.0
    %1219 = vmatprep.subr.mxu0 0.0
    %1220 = vmatpush1.msra.mxu0 0.0
    %1221 = vmatprep.subr.mxu0 0.0
    %1222 = vmatpush1.msra.mxu0 0.0
    %1223 = vmatprep.subr.mxu0 0.0
    %1224 = vmatpush1.msra.mxu0 0.0
    %1225 = vmatprep.subr.mxu0 0.0
    %1226 = vmatpush1.msra.mxu0 0.0
    %1227 = vmatprep.subr.mxu0 0.0
    %1228 = vmatpush1.msra.mxu0 0.0
    %1229 = vmatprep.subr.mxu0 0.0
    %1230 = vmatpush1.msra.mxu0 0.0
    %1231 = vmatprep.subr.mxu0 0.0
    %1232 = vmatpush1.msra.mxu0 0.0
    %1233 = vmatprep.subr.mxu0 0.0
    %1234 = vmatpush1.msra.mxu0 0.0
    %1235 = vmatprep.subr.mxu0 0.0
    %1236 = vmatpush1.msra.mxu0 0.0
    %1237 = vmatprep.subr.mxu0 0.0
    %1238 = vmatpush1.msra.mxu0 0.0
    %1239 = vmatprep.subr.mxu0 0.0
    %1240 = vmatpush1.msra.mxu0 0.0
    %1241 = vmatprep.subr.mxu0 0.0
    %1242 = vmatpush1.msra.mxu0 0.0
    %1243 = vmatprep.subr.mxu0 0.0
    %1244 = vmatpush1.msra.mxu0 0.0
    %1245 = vmatprep.subr.mxu0 0.0
    %1246 = vmatpush1.msra.mxu0 0.0
    %1247 = vmatprep.subr.mxu0 0.0
    %1248 = vmatpush1.msra.mxu0 0.0
    %1249 = vmatprep.mubr.f32.mxu0 0.0
    %1250 = vmatmul.mubr.f32.gmra.mrb[0].mxu0 %v1183
    %v1251 = vpop.f32.mrb[0].mxu0
    %v1252 = vadd.f32 0.0, %v1251
    %v1253 = vpop.f32.mrb[0].mxu0
    %1254 = vdwg.mxu0
    %s1255 = scalar_lea.vmem [#allocation8], 32
    %v1256 = vld [vmem:[%s1255] sm:$0xff]
    %v1257 = vld [vmem:[%s1255 + $0x8] sm:$0xff]
    %v1258 = vld [vmem:[%s1255 + $0x10] sm:$0xff]
    %v1259 = vld [vmem:[%s1255 + $0x18] sm:$0xff]
    %v1261 = vsel %vm133, %v1173, 0
    %v1264 = vsel %vm133, %v1252, 0
    %1266 = vmatprep.subr.mxu0 0.0
    %1267 = vmatpush1.msra.mxu0 %v1256
    %1268 = vmatprep.subr.mxu0 0.0
    %1269 = vmatpush1.msra.mxu0 %v1257
    %1270 = vmatprep.subr.mxu0 0.0
    %1271 = vmatpush1.msra.mxu0 %v1258
    %1272 = vmatprep.subr.mxu0 0.0
    %1273 = vmatpush1.msra.mxu0 %v1259
    %1274 = vmatprep.subr.mxu0 0.0
    %1275 = vmatpush1.msra.mxu0 0.0
    %1276 = vmatprep.subr.mxu0 0.0
    %1277 = vmatpush1.msra.mxu0 0.0
    %1278 = vmatprep.subr.mxu0 0.0
    %1279 = vmatpush1.msra.mxu0 0.0
    %1280 = vmatprep.subr.mxu0 0.0
    %1281 = vmatpush1.msra.mxu0 0.0
    %1282 = vmatprep.subr.mxu0 0.0
    %1283 = vmatpush1.msra.mxu0 0.0
    %1284 = vmatprep.subr.mxu0 0.0
    %1285 = vmatpush1.msra.mxu0 0.0
    %1286 = vmatprep.subr.mxu0 0.0
    %1287 = vmatpush1.msra.mxu0 0.0
    %1288 = vmatprep.subr.mxu0 0.0
    %1289 = vmatpush1.msra.mxu0 0.0
    %1290 = vmatprep.subr.mxu0 0.0
    %1291 = vmatpush1.msra.mxu0 0.0
    %1292 = vmatprep.subr.mxu0 0.0
    %1293 = vmatpush1.msra.mxu0 0.0
    %1294 = vmatprep.subr.mxu0 0.0
    %1295 = vmatpush1.msra.mxu0 0.0
    %1296 = vmatprep.subr.mxu0 0.0
    %1297 = vmatpush1.msra.mxu0 0.0
    %1298 = vmatprep.subr.mxu0 0.0
    %1299 = vmatpush1.msra.mxu0 0.0
    %1300 = vmatprep.subr.mxu0 0.0
    %1301 = vmatpush1.msra.mxu0 0.0
    %1302 = vmatprep.subr.mxu0 0.0
    %1303 = vmatpush1.msra.mxu0 0.0
    %1304 = vmatprep.subr.mxu0 0.0
    %1305 = vmatpush1.msra.mxu0 0.0
    %1306 = vmatprep.subr.mxu0 0.0
    %1307 = vmatpush1.msra.mxu0 0.0
    %1308 = vmatprep.subr.mxu0 0.0
    %1309 = vmatpush1.msra.mxu0 0.0
    %1310 = vmatprep.subr.mxu0 0.0
    %1311 = vmatpush1.msra.mxu0 0.0
    %1312 = vmatprep.subr.mxu0 0.0
    %1313 = vmatpush1.msra.mxu0 0.0
    %1314 = vmatprep.subr.mxu0 0.0
    %1315 = vmatpush1.msra.mxu0 0.0
    %1316 = vmatprep.subr.mxu0 0.0
    %1317 = vmatpush1.msra.mxu0 0.0
    %1318 = vmatprep.subr.mxu0 0.0
    %1319 = vmatpush1.msra.mxu0 0.0
    %1320 = vmatprep.subr.mxu0 0.0
    %1321 = vmatpush1.msra.mxu0 0.0
    %1322 = vmatprep.subr.mxu0 0.0
    %1323 = vmatpush1.msra.mxu0 0.0
    %1324 = vmatprep.subr.mxu0 0.0
    %1325 = vmatpush1.msra.mxu0 0.0
    %1326 = vmatprep.subr.mxu0 0.0
    %1327 = vmatpush1.msra.mxu0 0.0
    %1328 = vmatprep.subr.mxu0 0.0
    %1329 = vmatpush1.msra.mxu0 0.0
    %1330 = vmatprep.mubr.f32.mxu0 0.0
    %1331 = vmatmul.mubr.f32.gmra.mrb[0].mxu0 %v1261
    %v1332 = vpop.f32.mrb[0].mxu0
    %v1333 = vadd.f32 0.0, %v1332
    %v1334 = vpop.f32.mrb[0].mxu0
    %1335 = vmatprep.mubr.f32.mxu0 0.0
    %1336 = vmatmul.mubr.f32.gmra.mrb[0].mxu0 %v1264
    %v1337 = vpop.f32.mrb[0].mxu0
    %v1338 = vadd.f32 0.0, %v1337
    %v1339 = vpop.f32.mrb[0].mxu0
    %1340 = vdwg.mxu0
    %v1341 = vadd.f32 %v742, %v1333
    %v1342 = vadd.f32 %v743, %v1338
    %s1343 = scalar_lea.vmem [#allocation10], 32
    %v1344 = vld [vmem:[%s1343] sm:$0xff]
    %v1345 = vld [vmem:[%s1343 + $0x8] sm:$0xff]
    %v1346 = vld [vmem:[%s1343 + $0x10] sm:$0xff]
    %v1347 = vld [vmem:[%s1343 + $0x18] sm:$0xff]
    %v1349 = vsel %vm133, %v1341, 0
    %v1352 = vsel %vm133, %v1342, 0
    %1354 = vmatprep.subr.mxu0 0.0
    %1355 = vmatpush1.msra.mxu0 %v1344
    %1356 = vmatprep.subr.mxu0 0.0
    %1357 = vmatpush1.msra.mxu0 %v1345
    %1358 = vmatprep.subr.mxu0 0.0
    %1359 = vmatpush1.msra.mxu0 %v1346
    %1360 = vmatprep.subr.mxu0 0.0
    %1361 = vmatpush1.msra.mxu0 %v1347
    %1362 = vmatprep.subr.mxu0 0.0
    %1363 = vmatpush1.msra.mxu0 0.0
    %1364 = vmatprep.subr.mxu0 0.0
    %1365 = vmatpush1.msra.mxu0 0.0
    %1366 = vmatprep.subr.mxu0 0.0
    %1367 = vmatpush1.msra.mxu0 0.0
    %1368 = vmatprep.subr.mxu0 0.0
    %1369 = vmatpush1.msra.mxu0 0.0
    %1370 = vmatprep.subr.mxu0 0.0
    %1371 = vmatpush1.msra.mxu0 0.0
    %1372 = vmatprep.subr.mxu0 0.0
    %1373 = vmatpush1.msra.mxu0 0.0
    %1374 = vmatprep.subr.mxu0 0.0
    %1375 = vmatpush1.msra.mxu0 0.0
    %1376 = vmatprep.subr.mxu0 0.0
    %1377 = vmatpush1.msra.mxu0 0.0
    %1378 = vmatprep.subr.mxu0 0.0
    %1379 = vmatpush1.msra.mxu0 0.0
    %1380 = vmatprep.subr.mxu0 0.0
    %1381 = vmatpush1.msra.mxu0 0.0
    %1382 = vmatprep.subr.mxu0 0.0
    %1383 = vmatpush1.msra.mxu0 0.0
    %1384 = vmatprep.subr.mxu0 0.0
    %1385 = vmatpush1.msra.mxu0 0.0
    %1386 = vmatprep.subr.mxu0 0.0
    %1387 = vmatpush1.msra.mxu0 0.0
    %1388 = vmatprep.subr.mxu0 0.0
    %1389 = vmatpush1.msra.mxu0 0.0
    %1390 = vmatprep.subr.mxu0 0.0
    %1391 = vmatpush1.msra.mxu0 0.0
    %1392 = vmatprep.subr.mxu0 0.0
    %1393 = vmatpush1.msra.mxu0 0.0
    %1394 = vmatprep.subr.mxu0 0.0
    %1395 = vmatpush1.msra.mxu0 0.0
    %1396 = vmatprep.subr.mxu0 0.0
    %1397 = vmatpush1.msra.mxu0 0.0
    %1398 = vmatprep.subr.mxu0 0.0
    %1399 = vmatpush1.msra.mxu0 0.0
    %1400 = vmatprep.subr.mxu0 0.0
    %1401 = vmatpush1.msra.mxu0 0.0
    %1402 = vmatprep.subr.mxu0 0.0
    %1403 = vmatpush1.msra.mxu0 0.0
    %1404 = vmatprep.subr.mxu0 0.0
    %1405 = vmatpush1.msra.mxu0 0.0
    %1406 = vmatprep.subr.mxu0 0.0
    %1407 = vmatpush1.msra.mxu0 0.0
    %1408 = vmatprep.subr.mxu0 0.0
    %1409 = vmatpush1.msra.mxu0 0.0
    %1410 = vmatprep.subr.mxu0 0.0
    %1411 = vmatpush1.msra.mxu0 0.0
    %1412 = vmatprep.subr.mxu0 0.0
    %1413 = vmatpush1.msra.mxu0 0.0
    %1414 = vmatprep.subr.mxu0 0.0
    %1415 = vmatpush1.msra.mxu0 0.0
    %1416 = vmatprep.subr.mxu0 0.0
    %1417 = vmatpush1.msra.mxu0 0.0
    %1418 = vmatprep.mubr.f32.mxu0 0.0
    %1419 = vmatmul.mubr.f32.gmra.mrb[0].mxu0 %v1349
    %v1420 = vpop.f32.mrb[0].mxu0
    %v1421 = vadd.f32 0.0, %v1420
    %v1422 = vpop.f32.mrb[0].mxu0
    %1423 = vmatprep.mubr.f32.mxu0 0.0
    %1424 = vmatmul.mubr.f32.gmra.mrb[0].mxu0 %v1352
    %v1425 = vpop.f32.mrb[0].mxu0
    %v1426 = vadd.f32 0.0, %v1425
    %v1427 = vpop.f32.mrb[0].mxu0
    %1428 = vdwg.mxu0
    %v1429 = vadd.f32 %v829, %v1421
    %v1430 = vadd.f32 %v830, %v1426
    %v1431 = vld [vmem:[%s7] sm:$0x1]
    %v1432 = vld [vmem:[%s7 + $0x1] sm:$0x1]
    %v1433 = vsel %vm133, %v1341, 0.0
    %1434 = vadd.xlane.f32.xlu0 %v1433
    %v1435 = vpop.xlane.xlu0 %1434
    %v1436 = vsel %vm133, %v1342, 0.0
    %1437 = vadd.xlane.f32.xlu0 %v1436
    %v1438 = vpop.xlane.xlu0 %1437
    %v1439 = vrcp.pop 32.0
    %v1440 = vmul.f32 %v1435, %v1439
    %v1441 = vmul.f32 %v1438, %v1439
    %v1442 = vsub.f32 %v1341, %v1440
    %v1443 = vsub.f32 %v1342, %v1441
    %v1444 = vmul.f32 %v1442, %v1442
    %v1445 = vmul.f32 %v1443, %v1443
    %v1446 = vsel %vm133, %v1444, 0.0
    %1447 = vadd.xlane.f32.xlu0 %v1446
    %v1448 = vpop.xlane.xlu0 %1447
    %v1449 = vsel %vm133, %v1445, 0.0
    %1450 = vadd.xlane.f32.xlu0 %v1449
    %v1451 = vpop.xlane.xlu0 %1450
    %v1452 = vmul.f32 %v1448, %v1439
    %v1453 = vmul.f32 %v1451, %v1439
    %v1454 = vadd.f32 %v1452, 1e-05
    %v1455 = vadd.f32 %v1453, 1e-05
    %v1456 = vrsqrt.pop %v1454
    %v1457 = vrsqrt.pop %v1455
    %v1458 = vmul.f32 %v1442, %v1456
    %v1459 = vmul.f32 %v1443, %v1457
    %v1460 = vlaneseq
    %v1461 = vshrl.u32 %v1460, 7
    %v1462 = vsub.s32 0, %v1461
    %v1463 = vrot.slane %v1431, %v1462
    %v1464 = vmul.f32 %v1458, %v1463
    %v1465 = vmul.f32 %v1459, %v1463
    %v1466 = vlaneseq
    %v1467 = vshrl.u32 %v1466, 7
    %v1468 = vsub.s32 0, %v1467
    %v1469 = vrot.slane %v1432, %v1468
    %v1470 = vadd.f32 %v1464, %v1469
    %v1471 = vadd.f32 %v1465, %v1469
    %v1472 = vld [vmem:[#allocation11] sm:$0xff]
    %v1473 = vld [vmem:[#allocation11 + $0x8] sm:$0xff]
    %v1474 = vld [vmem:[#allocation11 + $0x10] sm:$0xff]
    %v1475 = vld [vmem:[#allocation11 + $0x18] sm:$0xff]
    %v1476 = vld [vmem:[%s9] sm:$0x1]
    %v1478 = vlaneseq
    %v1479 = vshrl.u32 %v1478, 7
    %v1480 = vsub.s32 0, %v1479
    %v1481 = vrot.slane %v1476, %v1480
    %v1484 = vsel %vm133, %v1470, 0
    %v1487 = vsel %vm133, %v1471, 0
    %1489 = vmatprep.subr.mxu0 0.0
    %1490 = vmatpush1.msra.mxu0 %v1472
    %1491 = vmatprep.subr.mxu0 0.0
    %1492 = vmatpush1.msra.mxu0 %v1473
    %1493 = vmatprep.subr.mxu0 0.0
    %1494 = vmatpush1.msra.mxu0 %v1474
    %1495 = vmatprep.subr.mxu0 0.0
    %1496 = vmatpush1.msra.mxu0 %v1475
    %1497 = vmatprep.subr.mxu0 0.0
    %1498 = vmatpush1.msra.mxu0 0.0
    %1499 = vmatprep.subr.mxu0 0.0
    %1500 = vmatpush1.msra.mxu0 0.0
    %1501 = vmatprep.subr.mxu0 0.0
    %1502 = vmatpush1.msra.mxu0 0.0
    %1503 = vmatprep.subr.mxu0 0.0
    %1504 = vmatpush1.msra.mxu0 0.0
    %1505 = vmatprep.subr.mxu0 0.0
    %1506 = vmatpush1.msra.mxu0 0.0
    %1507 = vmatprep.subr.mxu0 0.0
    %1508 = vmatpush1.msra.mxu0 0.0
    %1509 = vmatprep.subr.mxu0 0.0
    %1510 = vmatpush1.msra.mxu0 0.0
    %1511 = vmatprep.subr.mxu0 0.0
    %1512 = vmatpush1.msra.mxu0 0.0
    %1513 = vmatprep.subr.mxu0 0.0
    %1514 = vmatpush1.msra.mxu0 0.0
    %1515 = vmatprep.subr.mxu0 0.0
    %1516 = vmatpush1.msra.mxu0 0.0
    %1517 = vmatprep.subr.mxu0 0.0
    %1518 = vmatpush1.msra.mxu0 0.0
    %1519 = vmatprep.subr.mxu0 0.0
    %1520 = vmatpush1.msra.mxu0 0.0
    %1521 = vmatprep.subr.mxu0 0.0
    %1522 = vmatpush1.msra.mxu0 0.0
    %1523 = vmatprep.subr.mxu0 0.0
    %1524 = vmatpush1.msra.mxu0 0.0
    %1525 = vmatprep.subr.mxu0 0.0
    %1526 = vmatpush1.msra.mxu0 0.0
    %1527 = vmatprep.subr.mxu0 0.0
    %1528 = vmatpush1.msra.mxu0 0.0
    %1529 = vmatprep.subr.mxu0 0.0
    %1530 = vmatpush1.msra.mxu0 0.0
    %1531 = vmatprep.subr.mxu0 0.0
    %1532 = vmatpush1.msra.mxu0 0.0
    %1533 = vmatprep.subr.mxu0 0.0
    %1534 = vmatpush1.msra.mxu0 0.0
    %1535 = vmatprep.subr.mxu0 0.0
    %1536 = vmatpush1.msra.mxu0 0.0
    %1537 = vmatprep.subr.mxu0 0.0
    %1538 = vmatpush1.msra.mxu0 0.0
    %1539 = vmatprep.subr.mxu0 0.0
    %1540 = vmatpush1.msra.mxu0 0.0
    %1541 = vmatprep.subr.mxu0 0.0
    %1542 = vmatpush1.msra.mxu0 0.0
    %1543 = vmatprep.subr.mxu0 0.0
    %1544 = vmatpush1.msra.mxu0 0.0
    %1545 = vmatprep.subr.mxu0 0.0
    %1546 = vmatpush1.msra.mxu0 0.0
    %1547 = vmatprep.subr.mxu0 0.0
    %1548 = vmatpush1.msra.mxu0 0.0
    %1549 = vmatprep.subr.mxu0 0.0
    %1550 = vmatpush1.msra.mxu0 0.0
    %1551 = vmatprep.subr.mxu0 0.0
    %1552 = vmatpush1.msra.mxu0 0.0
    %1553 = vmatprep.mubr.f32.mxu0 0.0
    %1554 = vmatmul.mubr.f32.gmra.mrb[0].mxu0 %v1484
    %v1555 = vpop.f32.mrb[0].mxu0
    %v1556 = vadd.f32 %v1481, %v1555
    %v1557 = vpop.f32.mrb[0].mxu0
    %1558 = vmatprep.mubr.f32.mxu0 0.0
    %1559 = vmatmul.mubr.f32.gmra.mrb[0].mxu0 %v1487
    %v1560 = vpop.f32.mrb[0].mxu0
    %v1561 = vadd.f32 %v1481, %v1560
    %v1562 = vpop.f32.mrb[0].mxu0
    %1563 = vdwg.mxu0
    %1564 = vst [vmem:[#allocation13] sm:$0xff] %v1556
    %1565 = vst [vmem:[#allocation13 + $0x8] sm:$0xff] %v1561
    %1566 = vst [vmem:[#allocation14] sm:$0xff] %v1429
    %1567 = vst [vmem:[#allocation14 + $0x8] sm:$0xff] %v1430
    // Predicated region
    $region66: #{tpu_custom_call.1} parent=1 // pred_check
      _
    $region67: #{tpu_custom_call.1} parent=1 // pred_check_branch
      %1569 = sbr.rel (0) target = $region69
    $region68: #{tpu_custom_call.1} parent=1 // pred_region
      %s1571 = ssub.s32 256, 256
      %1572 = vsyncadd [#allocation4], %s1571
      %s1573 = sshll.u32 [#allocation13], 4
      %s1574 = int_to_ptr.vmem [resolvable:$true] %s1573
      %1579 = dma.vmem_to_hbm [thread:$0]  %s1574, 256, %s10, [#allocation4], 128, 128, 8
    $region69: #{tpu_custom_call.1} parent=1 // pred_fallthru
      _
    // Predicated region
    $region70: #{tpu_custom_call.1} parent=1 // pred_check
      _
    $region71: #{tpu_custom_call.1} parent=1 // pred_check_branch
      %1581 = sbr.rel (0) target = $region73
    $region72: #{tpu_custom_call.1} parent=1 // pred_region
      %s1583 = ssub.s32 256, 256
      %1584 = vsyncadd [#allocation15], %s1583
      %s1585 = sshll.u32 [#allocation14], 4
      %s1586 = int_to_ptr.vmem [resolvable:$true] %s1585
      %1591 = dma.vmem_to_hbm [thread:$0]  %s1586, 256, %s11, [#allocation15], 128, 128, 8
    $region73: #{tpu_custom_call.1} parent=1 // pred_fallthru
      _
    // Predicated region
    $region74: #{tpu_custom_call.1} parent=1 // pred_check
      _
    $region75: #{tpu_custom_call.1} parent=1 // pred_check_branch
      %1593 = sbr.rel (0) target = $region77
    $region76: #{tpu_custom_call.1} parent=1 // pred_region
      %1594 = dma.done [#allocation4], 256
    $region77: #{tpu_custom_call.1} parent=1 // pred_fallthru
      _
    // Predicated region
    $region78: #{tpu_custom_call.1} parent=1 // pred_check
      _
    $region79: #{tpu_custom_call.1} parent=1 // pred_check_branch
      %1596 = sbr.rel (0) target = $region81
    $region80: #{tpu_custom_call.1} parent=1 // pred_region
      %1597 = dma.done [#allocation15], 256
    $region81: #{tpu_custom_call.1} parent=1 // pred_fallthru
      _
    %1598 = vsyncpa [#allocation3], 1
    %1599 = vsyncpa [#allocation6], 1
    %1600 = vsyncpa [#allocation9], 1
    %1601 = vsyncpa [#allocation12], 1
    %1602 = vsyncpa [#allocation4], 1
    %1603 = vsyncpa [#allocation15], 1

</llo_original>
